<compile_context>
chip_gen: v5e
topology: v5e:2x2
jax: 0.10.0
libtpu: 0.0.40
codegen_flags: <defaults>
</compile_context>

<pallas_src>
import functools
import math

import jax
import jax.numpy as jnp
from jax.experimental import pallas as pl
from jax.experimental.pallas import tpu as pltpu


def _rab_kernel(x_ref, ln1_g, ln1_b, wqkv_t, bqkv, wo_t, bo,
                ln2_g, ln2_b, wfc_t, bfc, wproj_t, bproj, o_ref,
                qh_scr, kh_scr, vh_scr,
                *, d_model, n_head, q_block):
    D, H = d_model, n_head
    Dh = D // H
    L = x_ref.shape[1]
    TQ = q_block
    eps = 1e-5
    cdt = wqkv_t.dtype                       # matmul operand dtype (bf16)

    q_idx = pl.program_id(1)
    q0 = pl.multiple_of(q_idx * TQ, TQ)

    # ---- once per batch element (first query tile): LN1 + fused QKV over full L ----
    # qh/kh/vh scratch persists across the inner (query-tile) grid axis.
    @pl.when(q_idx == 0)
    def _():
        x = x_ref[0].astype(jnp.float32)                           # (L, D)
        mu = jnp.mean(x, axis=-1, keepdims=True)
        var = jnp.mean(jnp.square(x - mu), axis=-1, keepdims=True)
        h = ((x - mu) * jax.lax.rsqrt(var + eps)) * ln1_g[...] + ln1_b[...]
        # (L, D) @ (D, 3D); 1/sqrt(Dh) pre-folded into the Q columns
        qkv = jnp.dot(h.astype(cdt), wqkv_t[...],
                      preferred_element_type=jnp.float32) + bqkv[...]
        qkv_c = qkv.astype(cdt)                                    # (L, 3D)
        for i in range(H):                                         # head-major caches
            qh_scr[i] = qkv_c[:, i * Dh:(i + 1) * Dh]
            kh_scr[i] = qkv_c[:, D + i * Dh:D + (i + 1) * Dh]
            vh_scr[i] = qkv_c[:, 2 * D + i * Dh:2 * D + (i + 1) * Dh]

    # ---- per query tile ----
    x_q = x_ref[0, pl.ds(q0, TQ), :].astype(jnp.float32)           # (TQ, D) residual rows
    qh = qh_scr[:, pl.ds(q0, TQ), :]                               # (H, TQ, Dh), pre-scaled

    # scaled-dot-product attention, batched over heads
    s = jnp.einsum('hqd,hkd->hqk', qh, kh_scr[...],
                   preferred_element_type=jnp.float32)             # (H, TQ, L)
    m = jnp.max(s, axis=-1, keepdims=True)
    p = jnp.exp(s - m)
    p = p * pl.reciprocal(jnp.sum(p, axis=-1, keepdims=True), approx=True)
    o = jnp.einsum('hqk,hkd->hqd', p.astype(cdt), vh_scr[...],
                   preferred_element_type=jnp.float32)             # (H, TQ, Dh)

    # merge heads (single lane concat) + fused output projection
    o_c = o.astype(cdt)
    att = jnp.concatenate([o_c[i] for i in range(H)], axis=-1)     # (TQ, D)
    attn = jnp.dot(att, wo_t[...], preferred_element_type=jnp.float32) + bo[...]

    x1 = x_q + attn                                                # residual 1

    # ---- LayerNorm 2 ----
    mu2 = jnp.mean(x1, axis=-1, keepdims=True)
    var2 = jnp.mean(jnp.square(x1 - mu2), axis=-1, keepdims=True)
    h2 = (((x1 - mu2) * jax.lax.rsqrt(var2 + eps)) * ln2_g[...] + ln2_b[...]).astype(cdt)

    # ---- MLP: c_fc -> QuickGELU -> c_proj ----
    fc = jnp.dot(h2, wfc_t[...], preferred_element_type=jnp.float32) + bfc[...]   # (TQ, 4D)
    gelu = (fc * jax.nn.sigmoid(1.702 * fc)).astype(cdt)
    proj = jnp.dot(gelu, wproj_t[...], preferred_element_type=jnp.float32) + bproj[...]

    o_ref[0] = (x1 + proj).astype(o_ref.dtype)                     # residual 2


def prepare_params(params, d_model, n_head, compute_dtype=jnp.bfloat16):
    """One-time host-side weight prep: transpose, scale-fold, dtype cast.

    PyTorch layouts: in_proj (3D, D), out_proj (D, D), c_fc (4D, D), c_proj (D, 4D).
    """
    (ln1_g, ln1_b, wqkv, bqkv, wo, bo,
     ln2_g, ln2_b, wfc, bfc, wproj, bproj) = params
    D = d_model
    scale = 1.0 / math.sqrt(D // n_head)

    wqkv = wqkv.at[:D].multiply(scale)     # fold 1/sqrt(Dh) into Q rows of in_proj
    bqkv = bqkv.at[:D].multiply(scale)

    as_row = lambda a: a[None, :].astype(jnp.float32)      # (1, K) f32, clean 2-D layout
    return (as_row(ln1_g), as_row(ln1_b),
            wqkv.T.astype(compute_dtype), as_row(bqkv),    # (D, 3D)
            wo.T.astype(compute_dtype), as_row(bo),        # (D, D)
            as_row(ln2_g), as_row(ln2_b),
            wfc.T.astype(compute_dtype), as_row(bfc),      # (D, 4D)
            wproj.T.astype(compute_dtype), as_row(bproj))  # (4D, D)


def residual_attention_block(x_lnd, params, *, d_model, n_head,
                             q_block=None, compute_dtype=jnp.bfloat16):
    """x_lnd: (L, N, D), the torch nn.MultiheadAttention default layout."""
    L, N, D = x_lnd.shape
    assert D == d_model and D % n_head == 0
    Dh = D // n_head

    if q_block is None:
        q_block = next((t for t in (256, 128) if L % t == 0), L)
    assert L % q_block == 0 and (q_block % 8 == 0 or q_block == L)
    n_q = L // q_block

    weight_args = prepare_params(params, d_model, n_head, compute_dtype)
    x_nld = jnp.transpose(x_lnd, (1, 0, 2))                # (N, L, D)

    def full_spec(a):
        nd = a.ndim
        return pl.BlockSpec(a.shape, lambda b, q, nd=nd: (0,) * nd)

    kernel = functools.partial(_rab_kernel, d_model=d_model, n_head=n_head,
                               q_block=q_block)

    # Size scoped VMEM to actual residency (defaults: 16 MiB v5e / 32 MiB v6e, v7x).
    itemb = lambda a: a.size * jnp.dtype(a.dtype).itemsize
    cbytes = jnp.dtype(compute_dtype).itemsize
    weight_bytes = sum(itemb(a) for a in weight_args)
    io_block_bytes = (L * D + q_block * D) * jnp.dtype(x_lnd.dtype).itemsize
    scratch_bytes = 3 * n_head * L * max(Dh, 128) * cbytes       # lane-padded head caches
    act_bytes = 4 * (2 * L * D + L * 3 * D + 3 * n_head * q_block * L
                     + 2 * q_block * 4 * D + 4 * q_block * D)
    vmem_limit = int(min(100 * 2 ** 20,
                         max(32 * 2 ** 20,
                             2 * weight_bytes + 2 * io_block_bytes
                             + scratch_bytes + act_bytes)))

    out_nld = pl.pallas_call(
        kernel,
        out_shape=jax.ShapeDtypeStruct((N, L, D), x_lnd.dtype),
        grid_spec=pltpu.PrefetchScalarGridSpec(
            num_scalar_prefetch=0,
            grid=(N, n_q),
            in_specs=[pl.BlockSpec((1, L, D), lambda b, q: (b, 0, 0))]
                     + [full_spec(a) for a in weight_args],
            out_specs=pl.BlockSpec((1, q_block, D), lambda b, q: (b, q, 0)),
            scratch_shapes=[pltpu.VMEM((n_head, L, Dh), compute_dtype)] * 3,
        ),
        compiler_params=pltpu.CompilerParams(
            # inner axis carries the per-batch Q/K/V cache in scratch -> "arbitrary"
            dimension_semantics=("parallel", "arbitrary"),
            vmem_limit_bytes=vmem_limit),
    )(x_nld, *weight_args)

    return jnp.transpose(out_nld, (1, 0, 2))               # back to (L, N, D)


def make_params(key, d_model):
    D = d_model
    ks = jax.random.split(key, 8)
    std = 0.02
    ln1_g = 1.0 + 0.1 * jax.random.normal(ks[0], (D,), jnp.float32)
    ln1_b = 0.1 * jax.random.normal(ks[1], (D,), jnp.float32)
    wqkv = std * jax.random.normal(ks[2], (3 * D, D), jnp.float32)
    bqkv = 0.01 * jax.random.normal(ks[3], (3 * D,), jnp.float32)
    wo = std * jax.random.normal(ks[4], (D, D), jnp.float32)
    bo = 0.01 * jax.random.normal(ks[5], (D,), jnp.float32)
    ln2_g = 1.0 + 0.1 * jax.random.normal(ks[6], (D,), jnp.float32)
    ln2_b = 0.1 * jax.random.normal(ks[7], (D,), jnp.float32)
    k2 = jax.random.split(ks[0], 4)
    wfc = std * jax.random.normal(k2[0], (4 * D, D), jnp.float32)
    bfc = 0.01 * jax.random.normal(k2[1], (4 * D,), jnp.float32)
    wproj = std * jax.random.normal(k2[2], (D, 4 * D), jnp.float32)
    bproj = 0.01 * jax.random.normal(k2[3], (D,), jnp.float32)
    return (ln1_g, ln1_b, wqkv, bqkv, wo, bo,
            ln2_g, ln2_b, wfc, bfc, wproj, bproj)


def _reference_f32(x_lnd, params, n_head):
    """Pure-JAX f32 reference of the original module forward."""
    (ln1_g, ln1_b, wqkv, bqkv, wo, bo,
     ln2_g, ln2_b, wfc, bfc, wproj, bproj) = params
    L, N, D = x_lnd.shape
    H, Dh = n_head, D // n_head

    def ln(x, g, b):
        mu = x.mean(-1, keepdims=True)
        var = ((x - mu) ** 2).mean(-1, keepdims=True)
        return (x - mu) / jnp.sqrt(var + 1e-5) * g + b

    h = ln(x_lnd, ln1_g, ln1_b)
    qkv = jnp.einsum('lnd,ed->lne', h, wqkv) + bqkv
    q, k, v = jnp.split(qkv, 3, axis=-1)
    q = q.reshape(L, N, H, Dh).transpose(1, 2, 0, 3) / math.sqrt(Dh)
    k = k.reshape(L, N, H, Dh).transpose(1, 2, 0, 3)
    v = v.reshape(L, N, H, Dh).transpose(1, 2, 0, 3)
    s = jnp.einsum('nhld,nhmd->nhlm', q, k)
    p = jax.nn.softmax(s, axis=-1)
    o = jnp.einsum('nhlm,nhmd->nhld', p, v)
    o = o.transpose(2, 0, 1, 3).reshape(L, N, D)
    attn = jnp.einsum('lnd,ed->lne', o, wo) + bo
    x1 = x_lnd + attn
    h2 = ln(x1, ln2_g, ln2_b)
    fc = jnp.einsum('lnd,ed->lne', h2, wfc) + bfc
    gelu = fc * jax.nn.sigmoid(1.702 * fc)
    proj = jnp.einsum('lne,de->lnd', gelu, wproj) + bproj
    return x1 + proj


def _reference_prepared(x_lnd, prepared, n_head):
    """Pure-JAX reference with the SAME prepared (bf16, transposed, scale-folded)
    weights and the same mixed-precision scheme as the kernel (exact softmax)."""
    (ln1_g, ln1_b, wqkv_t, bqkv, wo_t, bo,
     ln2_g, ln2_b, wfc_t, bfc, wproj_t, bproj) = prepared
    cdt = wqkv_t.dtype
    L, N, D = x_lnd.shape
    H, Dh = n_head, D // n_head
    x = jnp.transpose(x_lnd, (1, 0, 2)).astype(jnp.float32)     # (N, L, D)

    def ln(t, g, b):
        mu = t.mean(-1, keepdims=True)
        var = ((t - mu) ** 2).mean(-1, keepdims=True)
        return (t - mu) * jax.lax.rsqrt(var + 1e-5) * g + b

    h = ln(x, ln1_g, ln1_b).astype(cdt)
    qkv = jnp.einsum('nld,de->nle', h, wqkv_t,
                     preferred_element_type=jnp.float32) + bqkv
    qkv = qkv.astype(cdt)
    q, k, v = qkv[..., :D], qkv[..., D:2 * D], qkv[..., 2 * D:]
    q = q.reshape(N, L, H, Dh).transpose(0, 2, 1, 3)
    k = k.reshape(N, L, H, Dh).transpose(0, 2, 1, 3)
    v = v.reshape(N, L, H, Dh).transpose(0, 2, 1, 3)
    s = jnp.einsum('nhqd,nhkd->nhqk', q, k, preferred_element_type=jnp.float32)
    p = jax.nn.softmax(s, axis=-1).astype(cdt)
    o = jnp.einsum('nhqk,nhkd->nhqd', p, v, preferred_element_type=jnp.float32)
    o = o.transpose(0, 2, 1, 3).reshape(N, L, D).astype(cdt)
    attn = jnp.einsum('nld,de->nle', o, wo_t,
                      preferred_element_type=jnp.float32) + bo
    x1 = x + attn
    h2 = ln(x1, ln2_g, ln2_b).astype(cdt)
    fc = jnp.einsum('nld,de->nle', h2, wfc_t,
                    preferred_element_type=jnp.float32) + bfc
    gelu = (fc * jax.nn.sigmoid(1.702 * fc)).astype(cdt)
    proj = jnp.einsum('nle,ed->nld', gelu, wproj_t,
                      preferred_element_type=jnp.float32) + bproj
    out = x1 + proj
    return jnp.transpose(out, (1, 0, 2)).astype(x_lnd.dtype)


if __name__ == "__main__":
    d_model, n_head = 32, 4
    L, N = 8, 2

    key = jax.random.PRNGKey(0)
    kx, kp = jax.random.split(key)
    x = jax.random.normal(kx, (L, N, d_model), jnp.float32)   # (seq, batch, d_model)
    params = make_params(kp, d_model)

    out = residual_attention_block(x, params, d_model=d_model, n_head=n_head)
    out = jax.block_until_ready(out)
    assert out.shape == (L, N, d_model)

    prepared = prepare_params(params, d_model, n_head)
    ref_match = _reference_prepared(x, prepared, n_head)      # same bf16 scheme
    ref_f32 = _reference_f32(x, params, n_head)               # original f32 semantics

    assert jnp.allclose(out, ref_match, atol=1e-2, rtol=1e-2), \
        "mismatch vs precision-matched reference"
    assert jnp.allclose(out, ref_f32, atol=5e-2, rtol=5e-2), \
        "mismatch vs f32 reference"

    print("KERNEL_OK")
</pallas_src>

<mosaic_0001>
module attributes {stable_mosaic.version = 11 : i64} {
  func.func @_rab_kernel(%arg0: i32, %arg1: i32, %arg2: memref<1x8x32xf32, #tpu.memory_space<vmem>>, %arg3: memref<1x32xf32, #tpu.memory_space<vmem>>, %arg4: memref<1x32xf32, #tpu.memory_space<vmem>>, %arg5: memref<32x96xbf16, #tpu.memory_space<vmem>>, %arg6: memref<1x96xf32, #tpu.memory_space<vmem>>, %arg7: memref<32x32xbf16, #tpu.memory_space<vmem>>, %arg8: memref<1x32xf32, #tpu.memory_space<vmem>>, %arg9: memref<1x32xf32, #tpu.memory_space<vmem>>, %arg10: memref<1x32xf32, #tpu.memory_space<vmem>>, %arg11: memref<32x128xbf16, #tpu.memory_space<vmem>>, %arg12: memref<1x128xf32, #tpu.memory_space<vmem>>, %arg13: memref<128x32xbf16, #tpu.memory_space<vmem>>, %arg14: memref<1x32xf32, #tpu.memory_space<vmem>>, %arg15: memref<1x8x32xf32, #tpu.memory_space<vmem>>, %arg16: memref<4x8x8xbf16, #tpu.memory_space<vmem>>, %arg17: memref<4x8x8xbf16, #tpu.memory_space<vmem>>, %arg18: memref<4x8x8xbf16, #tpu.memory_space<vmem>>) attributes {dimension_semantics = [#tpu.dimension_semantics<parallel>, #tpu.dimension_semantics<arbitrary>], iteration_bounds = array<i64: 2, 1>, scalar_prefetch = 0 : i64, scratch_operands = 3 : i64, tpu.core_type = #tpu.core_type<tc>, window_params = [{transform_indices = @transform_0, window_bounds = array<i64: 1, 8, 32>}, {pipeline_mode = #tpu.pipeline_mode<synchronous>, transform_indices = @transform_1, window_bounds = array<i64: 1, 32>}, {pipeline_mode = #tpu.pipeline_mode<synchronous>, transform_indices = @transform_2, window_bounds = array<i64: 1, 32>}, {pipeline_mode = #tpu.pipeline_mode<synchronous>, transform_indices = @transform_3, window_bounds = array<i64: 32, 96>}, {pipeline_mode = #tpu.pipeline_mode<synchronous>, transform_indices = @transform_4, window_bounds = array<i64: 1, 96>}, {pipeline_mode = #tpu.pipeline_mode<synchronous>, transform_indices = @transform_5, window_bounds = array<i64: 32, 32>}, {pipeline_mode = #tpu.pipeline_mode<synchronous>, transform_indices = @transform_6, window_bounds = array<i64: 1, 32>}, {pipeline_mode = #tpu.pipeline_mode<synchronous>, transform_indices = @transform_7, window_bounds = array<i64: 1, 32>}, {pipeline_mode = #tpu.pipeline_mode<synchronous>, transform_indices = @transform_8, window_bounds = array<i64: 1, 32>}, {pipeline_mode = #tpu.pipeline_mode<synchronous>, transform_indices = @transform_9, window_bounds = array<i64: 32, 128>}, {pipeline_mode = #tpu.pipeline_mode<synchronous>, transform_indices = @transform_10, window_bounds = array<i64: 1, 128>}, {pipeline_mode = #tpu.pipeline_mode<synchronous>, transform_indices = @transform_11, window_bounds = array<i64: 128, 32>}, {pipeline_mode = #tpu.pipeline_mode<synchronous>, transform_indices = @transform_12, window_bounds = array<i64: 1, 32>}, {transform_indices = @transform_13, window_bounds = array<i64: 1, 8, 32>}]} {
    %c8_i32 = arith.constant 8 : i32
    %0 = arith.muli %arg1, %c8_i32 : i32
    %1 = tpu.assume_multiple %0, 8 : i32
    %c0_i32 = arith.constant 0 : i32
    %2 = arith.cmpi eq, %arg1, %c0_i32 : i32
    %3 = arith.extui %2 : i1 to i32
    %c0_i32_0 = arith.constant 0 : i32
    %4 = arith.cmpi ne, %3, %c0_i32_0 : i32
    scf.if %4 {
      %c0_42 = arith.constant 0 : index
      %c0_43 = arith.constant 0 : index
      %c0_44 = arith.constant 0 : index
      %89 = vector.load %arg2[%c0_42, %c0_43, %c0_44] : memref<1x8x32xf32, #tpu.memory_space<vmem>>, vector<1x8x32xf32>
      %90 = vector.shape_cast %89 : vector<1x8x32xf32> to vector<8x32xf32>
      %cst_45 = arith.constant dense<0.000000e+00> : vector<8xf32>
      %91 = vector.multi_reduction <add>, %90, %cst_45 [1] : vector<8x32xf32> to vector<8xf32>
      %92 = vector.shape_cast %91 : vector<8xf32> to vector<8x1xf32>
      %cst_46 = arith.constant 3.200000e+01 : f32
      %93 = vector.broadcast %cst_46 : f32 to vector<8x1xf32>
      %94 = arith.divf %92, %93 : vector<8x1xf32>
      %95 = vector.broadcast %94 : vector<8x1xf32> to vector<8x32xf32>
      %96 = arith.subf %90, %95 : vector<8x32xf32>
      %97 = arith.mulf %96, %96 : vector<8x32xf32>
      %cst_47 = arith.constant dense<0.000000e+00> : vector<8xf32>
      %98 = vector.multi_reduction <add>, %97, %cst_47 [1] : vector<8x32xf32> to vector<8xf32>
      %99 = vector.shape_cast %98 : vector<8xf32> to vector<8x1xf32>
      %cst_48 = arith.constant 3.200000e+01 : f32
      %100 = vector.broadcast %cst_48 : f32 to vector<8x1xf32>
      %101 = arith.divf %99, %100 : vector<8x1xf32>
      %102 = vector.broadcast %94 : vector<8x1xf32> to vector<8x32xf32>
      %103 = arith.subf %90, %102 : vector<8x32xf32>
      %cst_49 = arith.constant 9.99999974E-6 : f32
      %104 = vector.broadcast %cst_49 : f32 to vector<8x1xf32>
      %105 = arith.addf %101, %104 : vector<8x1xf32>
      %106 = math.rsqrt %105 : vector<8x1xf32>
      %107 = vector.broadcast %106 : vector<8x1xf32> to vector<8x32xf32>
      %108 = arith.mulf %103, %107 : vector<8x32xf32>
      %c0_50 = arith.constant 0 : index
      %c0_51 = arith.constant 0 : index
      %109 = vector.load %arg3[%c0_50, %c0_51] : memref<1x32xf32, #tpu.memory_space<vmem>>, vector<1x32xf32>
      %110 = vector.broadcast %109 : vector<1x32xf32> to vector<8x32xf32>
      %111 = arith.mulf %108, %110 : vector<8x32xf32>
      %c0_52 = arith.constant 0 : index
      %c0_53 = arith.constant 0 : index
      %112 = vector.load %arg4[%c0_52, %c0_53] : memref<1x32xf32, #tpu.memory_space<vmem>>, vector<1x32xf32>
      %113 = vector.broadcast %112 : vector<1x32xf32> to vector<8x32xf32>
      %114 = arith.addf %111, %113 : vector<8x32xf32>
      %115 = arith.truncf %114 : vector<8x32xf32> to vector<8x32xbf16>
      %c0_54 = arith.constant 0 : index
      %c0_55 = arith.constant 0 : index
      %116 = vector.load %arg5[%c0_54, %c0_55] : memref<32x96xbf16, #tpu.memory_space<vmem>>, vector<32x96xbf16>
      %cst_56 = arith.constant dense<0.000000e+00> : vector<8x96xf32>
      %117 = tpu.matmul %115, %116, %cst_56 {dimension_numbers = #tpu.dot_dimension_numbers<[1], [0], [0], [1], [0, 0, 1, 1], [], []>} : vector<8x32xbf16>, vector<32x96xbf16>, vector<8x96xf32> -> vector<8x96xf32>
      %c0_57 = arith.constant 0 : index
      %c0_58 = arith.constant 0 : index
      %118 = vector.load %arg6[%c0_57, %c0_58] : memref<1x96xf32, #tpu.memory_space<vmem>>, vector<1x96xf32>
      %119 = vector.broadcast %118 : vector<1x96xf32> to vector<8x96xf32>
      %120 = arith.addf %117, %119 : vector<8x96xf32>
      %121 = arith.truncf %120 : vector<8x96xf32> to vector<8x96xbf16>
      %122 = vector.extract_strided_slice %121 {offsets = [0, 0], sizes = [8, 8], strides = [1, 1]} : vector<8x96xbf16> to vector<8x8xbf16>
      %c0_59 = arith.constant 0 : index
      %c0_60 = arith.constant 0 : index
      %c0_61 = arith.constant 0 : index
      %123 = vector.load %arg16[%c0_59, %c0_60, %c0_61] : memref<4x8x8xbf16, #tpu.memory_space<vmem>>, vector<1x8x8xbf16>
      %124 = vector.shape_cast %123 : vector<1x8x8xbf16> to vector<8x8xbf16>
      %125 = vector.shape_cast %122 : vector<8x8xbf16> to vector<1x8x8xbf16>
      tpu.vector_store %arg16[%c0_59, %c0_60, %c0_61], %125 {strides = array<i32>} : memref<4x8x8xbf16, #tpu.memory_space<vmem>>, vector<1x8x8xbf16>,
      %126 = vector.extract_strided_slice %121 {offsets = [0, 32], sizes = [8, 8], strides = [1, 1]} : vector<8x96xbf16> to vector<8x8xbf16>
      %c0_62 = arith.constant 0 : index
      %c0_63 = arith.constant 0 : index
      %c0_64 = arith.constant 0 : index
      %127 = vector.load %arg17[%c0_62, %c0_63, %c0_64] : memref<4x8x8xbf16, #tpu.memory_space<vmem>>, vector<1x8x8xbf16>
      %128 = vector.shape_cast %127 : vector<1x8x8xbf16> to vector<8x8xbf16>
      %129 = vector.shape_cast %126 : vector<8x8xbf16> to vector<1x8x8xbf16>
      tpu.vector_store %arg17[%c0_62, %c0_63, %c0_64], %129 {strides = array<i32>} : memref<4x8x8xbf16, #tpu.memory_space<vmem>>, vector<1x8x8xbf16>,
      %130 = vector.extract_strided_slice %121 {offsets = [0, 64], sizes = [8, 8], strides = [1, 1]} : vector<8x96xbf16> to vector<8x8xbf16>
      %c0_65 = arith.constant 0 : index
      %c0_66 = arith.constant 0 : index
      %c0_67 = arith.constant 0 : index
      %131 = vector.load %arg18[%c0_65, %c0_66, %c0_67] : memref<4x8x8xbf16, #tpu.memory_space<vmem>>, vector<1x8x8xbf16>
      %132 = vector.shape_cast %131 : vector<1x8x8xbf16> to vector<8x8xbf16>
      %133 = vector.shape_cast %130 : vector<8x8xbf16> to vector<1x8x8xbf16>
      tpu.vector_store %arg18[%c0_65, %c0_66, %c0_67], %133 {strides = array<i32>} : memref<4x8x8xbf16, #tpu.memory_space<vmem>>, vector<1x8x8xbf16>,
      %134 = vector.extract_strided_slice %121 {offsets = [0, 8], sizes = [8, 8], strides = [1, 1]} : vector<8x96xbf16> to vector<8x8xbf16>
      %c1 = arith.constant 1 : index
      %c0_68 = arith.constant 0 : index
      %c0_69 = arith.constant 0 : index
      %135 = vector.load %arg16[%c1, %c0_68, %c0_69] : memref<4x8x8xbf16, #tpu.memory_space<vmem>>, vector<1x8x8xbf16>
      %136 = vector.shape_cast %135 : vector<1x8x8xbf16> to vector<8x8xbf16>
      %137 = vector.shape_cast %134 : vector<8x8xbf16> to vector<1x8x8xbf16>
      tpu.vector_store %arg16[%c1, %c0_68, %c0_69], %137 {strides = array<i32>} : memref<4x8x8xbf16, #tpu.memory_space<vmem>>, vector<1x8x8xbf16>,
      %138 = vector.extract_strided_slice %121 {offsets = [0, 40], sizes = [8, 8], strides = [1, 1]} : vector<8x96xbf16> to vector<8x8xbf16>
      %c1_70 = arith.constant 1 : index
      %c0_71 = arith.constant 0 : index
      %c0_72 = arith.constant 0 : index
      %139 = vector.load %arg17[%c1_70, %c0_71, %c0_72] : memref<4x8x8xbf16, #tpu.memory_space<vmem>>, vector<1x8x8xbf16>
      %140 = vector.shape_cast %139 : vector<1x8x8xbf16> to vector<8x8xbf16>
      %141 = vector.shape_cast %138 : vector<8x8xbf16> to vector<1x8x8xbf16>
      tpu.vector_store %arg17[%c1_70, %c0_71, %c0_72], %141 {strides = array<i32>} : memref<4x8x8xbf16, #tpu.memory_space<vmem>>, vector<1x8x8xbf16>,
      %142 = vector.extract_strided_slice %121 {offsets = [0, 72], sizes = [8, 8], strides = [1, 1]} : vector<8x96xbf16> to vector<8x8xbf16>
      %c1_73 = arith.constant 1 : index
      %c0_74 = arith.constant 0 : index
      %c0_75 = arith.constant 0 : index
      %143 = vector.load %arg18[%c1_73, %c0_74, %c0_75] : memref<4x8x8xbf16, #tpu.memory_space<vmem>>, vector<1x8x8xbf16>
      %144 = vector.shape_cast %143 : vector<1x8x8xbf16> to vector<8x8xbf16>
      %145 = vector.shape_cast %142 : vector<8x8xbf16> to vector<1x8x8xbf16>
      tpu.vector_store %arg18[%c1_73, %c0_74, %c0_75], %145 {strides = array<i32>} : memref<4x8x8xbf16, #tpu.memory_space<vmem>>, vector<1x8x8xbf16>,
      %146 = vector.extract_strided_slice %121 {offsets = [0, 16], sizes = [8, 8], strides = [1, 1]} : vector<8x96xbf16> to vector<8x8xbf16>
      %c2 = arith.constant 2 : index
      %c0_76 = arith.constant 0 : index
      %c0_77 = arith.constant 0 : index
      %147 = vector.load %arg16[%c2, %c0_76, %c0_77] : memref<4x8x8xbf16, #tpu.memory_space<vmem>>, vector<1x8x8xbf16>
      %148 = vector.shape_cast %147 : vector<1x8x8xbf16> to vector<8x8xbf16>
      %149 = vector.shape_cast %146 : vector<8x8xbf16> to vector<1x8x8xbf16>
      tpu.vector_store %arg16[%c2, %c0_76, %c0_77], %149 {strides = array<i32>} : memref<4x8x8xbf16, #tpu.memory_space<vmem>>, vector<1x8x8xbf16>,
      %150 = vector.extract_strided_slice %121 {offsets = [0, 48], sizes = [8, 8], strides = [1, 1]} : vector<8x96xbf16> to vector<8x8xbf16>
      %c2_78 = arith.constant 2 : index
      %c0_79 = arith.constant 0 : index
      %c0_80 = arith.constant 0 : index
      %151 = vector.load %arg17[%c2_78, %c0_79, %c0_80] : memref<4x8x8xbf16, #tpu.memory_space<vmem>>, vector<1x8x8xbf16>
      %152 = vector.shape_cast %151 : vector<1x8x8xbf16> to vector<8x8xbf16>
      %153 = vector.shape_cast %150 : vector<8x8xbf16> to vector<1x8x8xbf16>
      tpu.vector_store %arg17[%c2_78, %c0_79, %c0_80], %153 {strides = array<i32>} : memref<4x8x8xbf16, #tpu.memory_space<vmem>>, vector<1x8x8xbf16>,
      %154 = vector.extract_strided_slice %121 {offsets = [0, 80], sizes = [8, 8], strides = [1, 1]} : vector<8x96xbf16> to vector<8x8xbf16>
      %c2_81 = arith.constant 2 : index
      %c0_82 = arith.constant 0 : index
      %c0_83 = arith.constant 0 : index
      %155 = vector.load %arg18[%c2_81, %c0_82, %c0_83] : memref<4x8x8xbf16, #tpu.memory_space<vmem>>, vector<1x8x8xbf16>
      %156 = vector.shape_cast %155 : vector<1x8x8xbf16> to vector<8x8xbf16>
      %157 = vector.shape_cast %154 : vector<8x8xbf16> to vector<1x8x8xbf16>
      tpu.vector_store %arg18[%c2_81, %c0_82, %c0_83], %157 {strides = array<i32>} : memref<4x8x8xbf16, #tpu.memory_space<vmem>>, vector<1x8x8xbf16>,
      %158 = vector.extract_strided_slice %121 {offsets = [0, 24], sizes = [8, 8], strides = [1, 1]} : vector<8x96xbf16> to vector<8x8xbf16>
      %c3 = arith.constant 3 : index
      %c0_84 = arith.constant 0 : index
      %c0_85 = arith.constant 0 : index
      %159 = vector.load %arg16[%c3, %c0_84, %c0_85] : memref<4x8x8xbf16, #tpu.memory_space<vmem>>, vector<1x8x8xbf16>
      %160 = vector.shape_cast %159 : vector<1x8x8xbf16> to vector<8x8xbf16>
      %161 = vector.shape_cast %158 : vector<8x8xbf16> to vector<1x8x8xbf16>
      tpu.vector_store %arg16[%c3, %c0_84, %c0_85], %161 {strides = array<i32>} : memref<4x8x8xbf16, #tpu.memory_space<vmem>>, vector<1x8x8xbf16>,
      %162 = vector.extract_strided_slice %121 {offsets = [0, 56], sizes = [8, 8], strides = [1, 1]} : vector<8x96xbf16> to vector<8x8xbf16>
      %c3_86 = arith.constant 3 : index
      %c0_87 = arith.constant 0 : index
      %c0_88 = arith.constant 0 : index
      %163 = vector.load %arg17[%c3_86, %c0_87, %c0_88] : memref<4x8x8xbf16, #tpu.memory_space<vmem>>, vector<1x8x8xbf16>
      %164 = vector.shape_cast %163 : vector<1x8x8xbf16> to vector<8x8xbf16>
      %165 = vector.shape_cast %162 : vector<8x8xbf16> to vector<1x8x8xbf16>
      tpu.vector_store %arg17[%c3_86, %c0_87, %c0_88], %165 {strides = array<i32>} : memref<4x8x8xbf16, #tpu.memory_space<vmem>>, vector<1x8x8xbf16>,
      %166 = vector.extract_strided_slice %121 {offsets = [0, 88], sizes = [8, 8], strides = [1, 1]} : vector<8x96xbf16> to vector<8x8xbf16>
      %c3_89 = arith.constant 3 : index
      %c0_90 = arith.constant 0 : index
      %c0_91 = arith.constant 0 : index
      %167 = vector.load %arg18[%c3_89, %c0_90, %c0_91] : memref<4x8x8xbf16, #tpu.memory_space<vmem>>, vector<1x8x8xbf16>
      %168 = vector.shape_cast %167 : vector<1x8x8xbf16> to vector<8x8xbf16>
      %169 = vector.shape_cast %166 : vector<8x8xbf16> to vector<1x8x8xbf16>
      tpu.vector_store %arg18[%c3_89, %c0_90, %c0_91], %169 {strides = array<i32>} : memref<4x8x8xbf16, #tpu.memory_space<vmem>>, vector<1x8x8xbf16>,
    } else {
    }
    %c0 = arith.constant 0 : index
    %5 = arith.index_cast %1 : i32 to index
    %c0_1 = arith.constant 0 : index
    %6 = vector.load %arg2[%c0, %5, %c0_1] : memref<1x8x32xf32, #tpu.memory_space<vmem>>, vector<1x8x32xf32>
    %7 = vector.shape_cast %6 : vector<1x8x32xf32> to vector<8x32xf32>
    %c0_2 = arith.constant 0 : index
    %8 = arith.index_cast %1 : i32 to index
    %c0_3 = arith.constant 0 : index
    %9 = vector.load %arg16[%c0_2, %8, %c0_3] : memref<4x8x8xbf16, #tpu.memory_space<vmem>>, vector<4x8x8xbf16>
    %c0_4 = arith.constant 0 : index
    %c0_5 = arith.constant 0 : index
    %c0_6 = arith.constant 0 : index
    %10 = vector.load %arg17[%c0_4, %c0_5, %c0_6] : memref<4x8x8xbf16, #tpu.memory_space<vmem>>, vector<4x8x8xbf16>
    "tpu.trace_start"() <{level = 10 : i32, message = "hqd,hkd->hqk"}> : () -> ()
    %cst = arith.constant dense<0.000000e+00> : vector<4x8x8xf32>
    %11 = tpu.matmul %9, %10, %cst {dimension_numbers = #tpu.dot_dimension_numbers<[2], [2], [1], [1], [0, 0, 0, 1, 1, 1], [0], [0]>} : vector<4x8x8xbf16>, vector<4x8x8xbf16>, vector<4x8x8xf32> -> vector<4x8x8xf32>
    "tpu.trace_stop"() : () -> ()
    %cst_7 = arith.constant dense<0xFF800000> : vector<4x8xf32>
    %12 = vector.multi_reduction <maximumf>, %11, %cst_7 [2] : vector<4x8x8xf32> to vector<4x8xf32>
    %13 = vector.shape_cast %12 : vector<4x8xf32> to vector<4x8x1xf32>
    %14 = vector.broadcast %13 : vector<4x8x1xf32> to vector<4x8x8xf32>
    %15 = arith.subf %11, %14 : vector<4x8x8xf32>
    %16 = math.exp %15 : vector<4x8x8xf32>
    %cst_8 = arith.constant dense<0.000000e+00> : vector<4x8xf32>
    %17 = vector.multi_reduction <add>, %16, %cst_8 [2] : vector<4x8x8xf32> to vector<4x8xf32>
    %18 = vector.shape_cast %17 : vector<4x8xf32> to vector<4x8x1xf32>
    %19 = tpu.reciprocal %18 {approx = true} : vector<4x8x1xf32> -> vector<4x8x1xf32>
    %20 = vector.broadcast %19 : vector<4x8x1xf32> to vector<4x8x8xf32>
    %21 = arith.mulf %16, %20 : vector<4x8x8xf32>
    %22 = arith.truncf %21 : vector<4x8x8xf32> to vector<4x8x8xbf16>
    %c0_9 = arith.constant 0 : index
    %c0_10 = arith.constant 0 : index
    %c0_11 = arith.constant 0 : index
    %23 = vector.load %arg18[%c0_9, %c0_10, %c0_11] : memref<4x8x8xbf16, #tpu.memory_space<vmem>>, vector<4x8x8xbf16>
    "tpu.trace_start"() <{level = 10 : i32, message = "hqk,hkd->hqd"}> : () -> ()
    %cst_12 = arith.constant dense<0.000000e+00> : vector<4x8x8xf32>
    %24 = tpu.matmul %22, %23, %cst_12 {dimension_numbers = #tpu.dot_dimension_numbers<[2], [1], [1], [2], [0, 0, 0, 1, 1, 2], [0], [0]>} : vector<4x8x8xbf16>, vector<4x8x8xbf16>, vector<4x8x8xf32> -> vector<4x8x8xf32>
    "tpu.trace_stop"() : () -> ()
    %25 = arith.truncf %24 : vector<4x8x8xf32> to vector<4x8x8xbf16>
    %26 = vector.extract_strided_slice %25 {offsets = [0, 0, 0], sizes = [1, 8, 8], strides = [1, 1, 1]} : vector<4x8x8xbf16> to vector<1x8x8xbf16>
    %27 = vector.shape_cast %26 : vector<1x8x8xbf16> to vector<8x8xbf16>
    %28 = vector.extract_strided_slice %25 {offsets = [1, 0, 0], sizes = [1, 8, 8], strides = [1, 1, 1]} : vector<4x8x8xbf16> to vector<1x8x8xbf16>
    %29 = vector.shape_cast %28 : vector<1x8x8xbf16> to vector<8x8xbf16>
    %30 = vector.extract_strided_slice %25 {offsets = [2, 0, 0], sizes = [1, 8, 8], strides = [1, 1, 1]} : vector<4x8x8xbf16> to vector<1x8x8xbf16>
    %31 = vector.shape_cast %30 : vector<1x8x8xbf16> to vector<8x8xbf16>
    %32 = vector.extract_strided_slice %25 {offsets = [3, 0, 0], sizes = [1, 8, 8], strides = [1, 1, 1]} : vector<4x8x8xbf16> to vector<1x8x8xbf16>
    %33 = vector.shape_cast %32 : vector<1x8x8xbf16> to vector<8x8xbf16>
    %34 = tpu.concatenate %27, %29, %31, %33 in 1 : vector<8x8xbf16>, vector<8x8xbf16>, vector<8x8xbf16>, vector<8x8xbf16> -> vector<8x32xbf16>
    %c0_13 = arith.constant 0 : index
    %c0_14 = arith.constant 0 : index
    %35 = vector.load %arg7[%c0_13, %c0_14] : memref<32x32xbf16, #tpu.memory_space<vmem>>, vector<32x32xbf16>
    %cst_15 = arith.constant dense<0.000000e+00> : vector<8x32xf32>
    %36 = tpu.matmul %34, %35, %cst_15 {dimension_numbers = #tpu.dot_dimension_numbers<[1], [0], [0], [1], [0, 0, 1, 1], [], []>} : vector<8x32xbf16>, vector<32x32xbf16>, vector<8x32xf32> -> vector<8x32xf32>
    %c0_16 = arith.constant 0 : index
    %c0_17 = arith.constant 0 : index
    %37 = vector.load %arg8[%c0_16, %c0_17] : memref<1x32xf32, #tpu.memory_space<vmem>>, vector<1x32xf32>
    %38 = vector.broadcast %37 : vector<1x32xf32> to vector<8x32xf32>
    %39 = arith.addf %36, %38 : vector<8x32xf32>
    %40 = arith.addf %7, %39 : vector<8x32xf32>
    %cst_18 = arith.constant dense<0.000000e+00> : vector<8xf32>
    %41 = vector.multi_reduction <add>, %40, %cst_18 [1] : vector<8x32xf32> to vector<8xf32>
    %42 = vector.shape_cast %41 : vector<8xf32> to vector<8x1xf32>
    %cst_19 = arith.constant 3.200000e+01 : f32
    %43 = vector.broadcast %cst_19 : f32 to vector<8x1xf32>
    %44 = arith.divf %42, %43 : vector<8x1xf32>
    %45 = vector.broadcast %44 : vector<8x1xf32> to vector<8x32xf32>
    %46 = arith.subf %40, %45 : vector<8x32xf32>
    %47 = arith.mulf %46, %46 : vector<8x32xf32>
    %cst_20 = arith.constant dense<0.000000e+00> : vector<8xf32>
    %48 = vector.multi_reduction <add>, %47, %cst_20 [1] : vector<8x32xf32> to vector<8xf32>
    %49 = vector.shape_cast %48 : vector<8xf32> to vector<8x1xf32>
    %cst_21 = arith.constant 3.200000e+01 : f32
    %50 = vector.broadcast %cst_21 : f32 to vector<8x1xf32>
    %51 = arith.divf %49, %50 : vector<8x1xf32>
    %52 = vector.broadcast %44 : vector<8x1xf32> to vector<8x32xf32>
    %53 = arith.subf %40, %52 : vector<8x32xf32>
    %cst_22 = arith.constant 9.99999974E-6 : f32
    %54 = vector.broadcast %cst_22 : f32 to vector<8x1xf32>
    %55 = arith.addf %51, %54 : vector<8x1xf32>
    %56 = math.rsqrt %55 : vector<8x1xf32>
    %57 = vector.broadcast %56 : vector<8x1xf32> to vector<8x32xf32>
    %58 = arith.mulf %53, %57 : vector<8x32xf32>
    %c0_23 = arith.constant 0 : index
    %c0_24 = arith.constant 0 : index
    %59 = vector.load %arg9[%c0_23, %c0_24] : memref<1x32xf32, #tpu.memory_space<vmem>>, vector<1x32xf32>
    %60 = vector.broadcast %59 : vector<1x32xf32> to vector<8x32xf32>
    %61 = arith.mulf %58, %60 : vector<8x32xf32>
    %c0_25 = arith.constant 0 : index
    %c0_26 = arith.constant 0 : index
    %62 = vector.load %arg10[%c0_25, %c0_26] : memref<1x32xf32, #tpu.memory_space<vmem>>, vector<1x32xf32>
    %63 = vector.broadcast %62 : vector<1x32xf32> to vector<8x32xf32>
    %64 = arith.addf %61, %63 : vector<8x32xf32>
    %65 = arith.truncf %64 : vector<8x32xf32> to vector<8x32xbf16>
    %c0_27 = arith.constant 0 : index
    %c0_28 = arith.constant 0 : index
    %66 = vector.load %arg11[%c0_27, %c0_28] : memref<32x128xbf16, #tpu.memory_space<vmem>>, vector<32x128xbf16>
    %cst_29 = arith.constant dense<0.000000e+00> : vector<8x128xf32>
    %67 = tpu.matmul %65, %66, %cst_29 {dimension_numbers = #tpu.dot_dimension_numbers<[1], [0], [0], [1], [0, 0, 1, 1], [], []>} : vector<8x32xbf16>, vector<32x128xbf16>, vector<8x128xf32> -> vector<8x128xf32>
    %c0_30 = arith.constant 0 : index
    %c0_31 = arith.constant 0 : index
    %68 = vector.load %arg12[%c0_30, %c0_31] : memref<1x128xf32, #tpu.memory_space<vmem>>, vector<1x128xf32>
    %69 = vector.broadcast %68 : vector<1x128xf32> to vector<8x128xf32>
    %70 = arith.addf %67, %69 : vector<8x128xf32>
    %cst_32 = arith.constant 1.702000e+00 : f32
    %71 = vector.broadcast %cst_32 : f32 to vector<8x128xf32>
    %72 = arith.mulf %71, %70 : vector<8x128xf32>
    %73 = arith.negf %72 : vector<8x128xf32>
    %74 = math.exp %73 : vector<8x128xf32>
    %cst_33 = arith.constant 1.000000e+00 : f32
    %75 = vector.broadcast %cst_33 : f32 to vector<8x128xf32>
    %76 = arith.addf %75, %74 : vector<8x128xf32>
    %77 = arith.divf %75, %76 : vector<8x128xf32>
    %78 = arith.mulf %70, %77 : vector<8x128xf32>
    %79 = arith.truncf %78 : vector<8x128xf32> to vector<8x128xbf16>
    %c0_34 = arith.constant 0 : index
    %c0_35 = arith.constant 0 : index
    %80 = vector.load %arg13[%c0_34, %c0_35] : memref<128x32xbf16, #tpu.memory_space<vmem>>, vector<128x32xbf16>
    %cst_36 = arith.constant dense<0.000000e+00> : vector<8x32xf32>
    %81 = tpu.matmul %79, %80, %cst_36 {dimension_numbers = #tpu.dot_dimension_numbers<[1], [0], [0], [1], [0, 0, 1, 1], [], []>} : vector<8x128xbf16>, vector<128x32xbf16>, vector<8x32xf32> -> vector<8x32xf32>
    %c0_37 = arith.constant 0 : index
    %c0_38 = arith.constant 0 : index
    %82 = vector.load %arg14[%c0_37, %c0_38] : memref<1x32xf32, #tpu.memory_space<vmem>>, vector<1x32xf32>
    %83 = vector.broadcast %82 : vector<1x32xf32> to vector<8x32xf32>
    %84 = arith.addf %81, %83 : vector<8x32xf32>
    %85 = arith.addf %40, %84 : vector<8x32xf32>
    %c0_39 = arith.constant 0 : index
    %c0_40 = arith.constant 0 : index
    %c0_41 = arith.constant 0 : index
    %86 = vector.load %arg15[%c0_39, %c0_40, %c0_41] : memref<1x8x32xf32, #tpu.memory_space<vmem>>, vector<1x8x32xf32>
    %87 = vector.shape_cast %86 : vector<1x8x32xf32> to vector<8x32xf32>
    %88 = vector.shape_cast %85 : vector<8x32xf32> to vector<1x8x32xf32>
    tpu.vector_store %arg15[%c0_39, %c0_40, %c0_41], %88 {strides = array<i32>} : memref<1x8x32xf32, #tpu.memory_space<vmem>>, vector<1x8x32xf32>,
    return
  }
  func.func @transform_0(%arg0: i32, %arg1: i32) -> (i32, i32, i32) {
    %c0_i32 = arith.constant 0 : i32
    %c0_i32_0 = arith.constant 0 : i32
    %c0_i32_1 = arith.constant 0 : i32
    return %arg0, %c0_i32, %c0_i32_0 : i32, i32, i32
  }
  func.func @transform_1(%arg0: i32, %arg1: i32) -> (i32, i32) {
    %c0_i32 = arith.constant 0 : i32
    %c0_i32_0 = arith.constant 0 : i32
    %c0_i32_1 = arith.constant 0 : i32
    return %c0_i32, %c0_i32_0 : i32, i32
  }
  func.func @transform_2(%arg0: i32, %arg1: i32) -> (i32, i32) {
    %c0_i32 = arith.constant 0 : i32
    %c0_i32_0 = arith.constant 0 : i32
    %c0_i32_1 = arith.constant 0 : i32
    return %c0_i32, %c0_i32_0 : i32, i32
  }
  func.func @transform_3(%arg0: i32, %arg1: i32) -> (i32, i32) {
    %c0_i32 = arith.constant 0 : i32
    %c0_i32_0 = arith.constant 0 : i32
    %c0_i32_1 = arith.constant 0 : i32
    return %c0_i32, %c0_i32_0 : i32, i32
  }
  func.func @transform_4(%arg0: i32, %arg1: i32) -> (i32, i32) {
    %c0_i32 = arith.constant 0 : i32
    %c0_i32_0 = arith.constant 0 : i32
    %c0_i32_1 = arith.constant 0 : i32
    return %c0_i32, %c0_i32_0 : i32, i32
  }
  func.func @transform_5(%arg0: i32, %arg1: i32) -> (i32, i32) {
    %c0_i32 = arith.constant 0 : i32
    %c0_i32_0 = arith.constant 0 : i32
    %c0_i32_1 = arith.constant 0 : i32
    return %c0_i32, %c0_i32_0 : i32, i32
  }
  func.func @transform_6(%arg0: i32, %arg1: i32) -> (i32, i32) {
    %c0_i32 = arith.constant 0 : i32
    %c0_i32_0 = arith.constant 0 : i32
    %c0_i32_1 = arith.constant 0 : i32
    return %c0_i32, %c0_i32_0 : i32, i32
  }
  func.func @transform_7(%arg0: i32, %arg1: i32) -> (i32, i32) {
    %c0_i32 = arith.constant 0 : i32
    %c0_i32_0 = arith.constant 0 : i32
    %c0_i32_1 = arith.constant 0 : i32
    return %c0_i32, %c0_i32_0 : i32, i32
  }
  func.func @transform_8(%arg0: i32, %arg1: i32) -> (i32, i32) {
    %c0_i32 = arith.constant 0 : i32
    %c0_i32_0 = arith.constant 0 : i32
    %c0_i32_1 = arith.constant 0 : i32
    return %c0_i32, %c0_i32_0 : i32, i32
  }
  func.func @transform_9(%arg0: i32, %arg1: i32) -> (i32, i32) {
    %c0_i32 = arith.constant 0 : i32
    %c0_i32_0 = arith.constant 0 : i32
    %c0_i32_1 = arith.constant 0 : i32
    return %c0_i32, %c0_i32_0 : i32, i32
  }
  func.func @transform_10(%arg0: i32, %arg1: i32) -> (i32, i32) {
    %c0_i32 = arith.constant 0 : i32
    %c0_i32_0 = arith.constant 0 : i32
    %c0_i32_1 = arith.constant 0 : i32
    return %c0_i32, %c0_i32_0 : i32, i32
  }
  func.func @transform_11(%arg0: i32, %arg1: i32) -> (i32, i32) {
    %c0_i32 = arith.constant 0 : i32
    %c0_i32_0 = arith.constant 0 : i32
    %c0_i32_1 = arith.constant 0 : i32
    return %c0_i32, %c0_i32_0 : i32, i32
  }
  func.func @transform_12(%arg0: i32, %arg1: i32) -> (i32, i32) {
    %c0_i32 = arith.constant 0 : i32
    %c0_i32_0 = arith.constant 0 : i32
    %c0_i32_1 = arith.constant 0 : i32
    return %c0_i32, %c0_i32_0 : i32, i32
  }
  func.func @transform_13(%arg0: i32, %arg1: i32) -> (i32, i32, i32) {
    %c0_i32 = arith.constant 0 : i32
    %c0_i32_0 = arith.constant 0 : i32
    return %arg0, %arg1, %c0_i32 : i32, i32, i32
  }
}

</mosaic_0001>

<llo_original>
// kernel: tpu_custom_call.1
$region0: #{tpu_custom_call.1}
  #allocation0 [shape = 'u32[]', space=smem, size = 0x4, offset = 0x4, fixed_abs, tag = 'smem constant byte address 0x4 - core index']
  #allocation1 [shape = 'u32[72,128]{1,0:T(1,128)}', space=vmem, size = 0x9000, scoped, tag = 'internal scratch']
  #allocation2 [shape = 'bf16[4,8,8]{2,1,0:T(8,128)(2,1)}', space=vmem, size = 0x2000, scoped, tag = 'scratch operand']
  #allocation3 [shape = 'bf16[4,8,8]{2,1,0:T(8,128)(2,1)}', space=vmem, size = 0x2000, scoped, tag = 'scratch operand']
  #allocation4 [shape = 'bf16[4,8,8]{2,1,0:T(8,128)(2,1)}', space=vmem, size = 0x2000, scoped, tag = 'scratch operand']
  %s0 = inlined_call_operand.vmem [shape: f32[2,8,32], index: 0, kind: input, shape index: {}]
  %s1 = inlined_call_operand.vmem [shape: f32[1,32], index: 1, kind: input, shape index: {}]
  %s2 = inlined_call_operand.vmem [shape: f32[1,32], index: 2, kind: input, shape index: {}]
  %s3 = inlined_call_operand.vmem [shape: bf16[32,96], index: 3, kind: input, shape index: {}]
  %s4 = inlined_call_operand.vmem [shape: f32[1,96], index: 4, kind: input, shape index: {}]
  %s5 = inlined_call_operand.vmem [shape: bf16[32,32], index: 5, kind: input, shape index: {}]
  %s6 = inlined_call_operand.vmem [shape: f32[1,32], index: 6, kind: input, shape index: {}]
  %s7 = inlined_call_operand.vmem [shape: f32[1,32], index: 7, kind: input, shape index: {}]
  %s8 = inlined_call_operand.vmem [shape: f32[1,32], index: 8, kind: input, shape index: {}]
  %s9 = inlined_call_operand.vmem [shape: bf16[32,128], index: 9, kind: input, shape index: {}]
  %s10 = inlined_call_operand.vmem [shape: f32[1,128], index: 10, kind: input, shape index: {}]
  %s11 = inlined_call_operand.vmem [shape: bf16[128,32], index: 11, kind: input, shape index: {}]
  %s12 = inlined_call_operand.vmem [shape: f32[1,32], index: 12, kind: input, shape index: {}]
  %s13 = inlined_call_operand.hbm [shape: f32[2,8,32], index: 13, kind: output, shape index: {}]
  %s14 = sld [smem:[#allocation0]]
  $region89: #{tpu_custom_call.1} parent=0
    _
  %s16 = ssub.s32 1, %s14
  %s17 = scalar_select 0, %s16, %s14
  $region1: #{tpu_custom_call.1} parent=0
    #allocation5 [shape = 'u8[8192]{0}', space=vmem, size = 0x2000, scoped, tag = 'output window, operand 0']
    #allocation6 [shape = 's32[2]{0}', space=sflag, size = 0x8, scoped, tag = 'scoped memory for tpu_custom_call.1']
    %18 = vsyncpa [#allocation6], 0
    %s19 = scalar_lea.sflag [#allocation6], 1
    %20 = vsyncpa %s19, 0
    loop: start=0, step=1, limit=4
    $region2: #{tpu_custom_call.1} parent=1 // loop_pre_header
      _
    $region3: #{tpu_custom_call.1} parent=1 // loop_header
      %s22 = sphi 0, %s26
      %p23 = scmp.ge.s32.totalorder %s22, 4
      %s29 = sphi 0, %s41
      %s30 = sphi 0, %s37
      %s31 = sphi 0, %s29
      %s32 = sphi 0, %s30
      %s33 = sphi 0, %s31
      %s34 = sphi 0, %s32
      %s44 = sphi 0, %s46
      %s47 = sphi 0, %s44
      %s48 = sphi 0, %s47
      %s64 = sphi 0, %s48
      %s68 = sphi 0, %s68
      %s70 = sphi 0, %s68
      %s71 = sphi 0, %s70
      %s85 = sphi 0, %s71
      %s89 = sphi 0, %s89
      %s91 = sphi 0, %s89
      %s92 = sphi 0, %s91
      %s106 = sphi 0, %s92
      %s110 = sphi 0, %s110
      %s112 = sphi 0, %s110
      %s113 = sphi 0, %s112
      %s127 = sphi 0, %s113
      %s131 = sphi 0, %s131
      %s133 = sphi 0, %s131
      %s134 = sphi 0, %s133
      %s148 = sphi 0, %s134
      %s152 = sphi 0, %s152
      %s154 = sphi 0, %s152
      %s155 = sphi 0, %s154
      %s169 = sphi 0, %s155
      %s173 = sphi 0, %s173
      %s175 = sphi 0, %s173
      %s176 = sphi 0, %s175
      %s190 = sphi 0, %s176
      %s194 = sphi 0, %s194
      %s196 = sphi 0, %s194
      %s197 = sphi 0, %s196
      %s211 = sphi 0, %s197
      %s215 = sphi 0, %s215
      %s217 = sphi 0, %s215
      %s218 = sphi 0, %s217
      %s232 = sphi 0, %s218
      %s236 = sphi 0, %s236
      %s238 = sphi 0, %s236
      %s239 = sphi 0, %s238
      %s253 = sphi 0, %s239
      %s257 = sphi 0, %s257
      %s259 = sphi 0, %s257
      %s260 = sphi 0, %s259
      %s274 = sphi 0, %s260
      %s278 = sphi 0, %s278
      %s280 = sphi 0, %s278
      %s281 = sphi 0, %s280
      %s295 = sphi 0, %s281
      %s299 = sphi 0, %s299
      %s301 = sphi 0, %s299
      %s302 = sphi 0, %s301
      %s316 = sphi 0, %s302
      %s324 = sphi 0, %s326
      %s327 = sphi 0, %s324
      %s328 = sphi 0, %s327
      %s344 = sphi 0, %s328
    $region4: #{tpu_custom_call.1} parent=1 // loop_header_branch
      %25 = sbr.rel (%p23) target = $region8
    $region5: #{tpu_custom_call.1} parent=1 // loop_body
      %s27 = ssub.s32 %s22, 1
      %s28 = ssub.s32 %s22, 2
      %s35 = sadd.s32 1, %s30
      %p36 = scmp.ge.s32.totalorder %s35, 1
      %s37 = scalar_select %p36, 0, %s35
      %s38 = sadd.s32 1, %s29
      %s39 = scalar_select %p36, %s38, %s29
      %p40 = scmp.ge.s32.totalorder %s39, 2
      %s41 = scalar_select %p40, 0, %s39
      %s42 = ssub.s32 %s29, %s41
      %p43 = scmp.eq.s32.totalorder %s42, 0
      %s45 = sadd.s32 %s44, 1
      %s46 = scalar_select %p43, %s44, %s45
      %p49 = pneg %p43
      %p50 = scmp.eq.s32.totalorder %s22, 1
      %p51 = por %p49, %p50
      %p52 = scmp.ne.s32.totalorder %s44, %s47
      %p53 = scmp.eq.s32.totalorder %s22, 0
      %p54 = por %p52, %p53
      %p55 = scmp.ne.s32.totalorder %s44, %s47
      %p56 = scmp.eq.s32.totalorder %s27, 1
      %p57 = por %p55, %p56
      %p58 = scmp.ne.s32.totalorder %s47, %s48
      %p59 = scmp.eq.s32.totalorder %s27, 0
      %p60 = por %p58, %p59
      %p61 = scmp.ne.s32.totalorder %s47, %s48
      %p62 = scmp.eq.s32.totalorder %s28, 1
      %p63 = por %p61, %p62
      %p65 = scmp.ne.s32.totalorder %s48, %s64
      %p66 = scmp.eq.s32.totalorder %s28, 0
      %p67 = por %p65, %p66
      %s69 = sadd.s32 %s68, 1
      %p72 = scmp.eq.s32.totalorder %s22, 1
      %p73 = scmp.ne.s32.totalorder %s68, %s70
      %p74 = scmp.eq.s32.totalorder %s22, 0
      %p75 = por %p73, %p74
      %p76 = scmp.ne.s32.totalorder %s68, %s70
      %p77 = scmp.eq.s32.totalorder %s27, 1
      %p78 = por %p76, %p77
      %p79 = scmp.ne.s32.totalorder %s70, %s71
      %p80 = scmp.eq.s32.totalorder %s27, 0
      %p81 = por %p79, %p80
      %p82 = scmp.ne.s32.totalorder %s70, %s71
      %p83 = scmp.eq.s32.totalorder %s28, 1
      %p84 = por %p82, %p83
      %p86 = scmp.ne.s32.totalorder %s71, %s85
      %p87 = scmp.eq.s32.totalorder %s28, 0
      %p88 = por %p86, %p87
      %s90 = sadd.s32 %s89, 1
      %p93 = scmp.eq.s32.totalorder %s22, 1
      %p94 = scmp.ne.s32.totalorder %s89, %s91
      %p95 = scmp.eq.s32.totalorder %s22, 0
      %p96 = por %p94, %p95
      %p97 = scmp.ne.s32.totalorder %s89, %s91
      %p98 = scmp.eq.s32.totalorder %s27, 1
      %p99 = por %p97, %p98
      %p100 = scmp.ne.s32.totalorder %s91, %s92
      %p101 = scmp.eq.s32.totalorder %s27, 0
      %p102 = por %p100, %p101
      %p103 = scmp.ne.s32.totalorder %s91, %s92
      %p104 = scmp.eq.s32.totalorder %s28, 1
      %p105 = por %p103, %p104
      %p107 = scmp.ne.s32.totalorder %s92, %s106
      %p108 = scmp.eq.s32.totalorder %s28, 0
      %p109 = por %p107, %p108
      %s111 = sadd.s32 %s110, 1
      %p114 = scmp.eq.s32.totalorder %s22, 1
      %p115 = scmp.ne.s32.totalorder %s110, %s112
      %p116 = scmp.eq.s32.totalorder %s22, 0
      %p117 = por %p115, %p116
      %p118 = scmp.ne.s32.totalorder %s110, %s112
      %p119 = scmp.eq.s32.totalorder %s27, 1
      %p120 = por %p118, %p119
      %p121 = scmp.ne.s32.totalorder %s112, %s113
      %p122 = scmp.eq.s32.totalorder %s27, 0
      %p123 = por %p121, %p122
      %p124 = scmp.ne.s32.totalorder %s112, %s113
      %p125 = scmp.eq.s32.totalorder %s28, 1
      %p126 = por %p124, %p125
      %p128 = scmp.ne.s32.totalorder %s113, %s127
      %p129 = scmp.eq.s32.totalorder %s28, 0
      %p130 = por %p128, %p129
      %s132 = sadd.s32 %s131, 1
      %p135 = scmp.eq.s32.totalorder %s22, 1
      %p136 = scmp.ne.s32.totalorder %s131, %s133
      %p137 = scmp.eq.s32.totalorder %s22, 0
      %p138 = por %p136, %p137
      %p139 = scmp.ne.s32.totalorder %s131, %s133
      %p140 = scmp.eq.s32.totalorder %s27, 1
      %p141 = por %p139, %p140
      %p142 = scmp.ne.s32.totalorder %s133, %s134
      %p143 = scmp.eq.s32.totalorder %s27, 0
      %p144 = por %p142, %p143
      %p145 = scmp.ne.s32.totalorder %s133, %s134
      %p146 = scmp.eq.s32.totalorder %s28, 1
      %p147 = por %p145, %p146
      %p149 = scmp.ne.s32.totalorder %s134, %s148
      %p150 = scmp.eq.s32.totalorder %s28, 0
      %p151 = por %p149, %p150
      %s153 = sadd.s32 %s152, 1
      %p156 = scmp.eq.s32.totalorder %s22, 1
      %p157 = scmp.ne.s32.totalorder %s152, %s154
      %p158 = scmp.eq.s32.totalorder %s22, 0
      %p159 = por %p157, %p158
      %p160 = scmp.ne.s32.totalorder %s152, %s154
      %p161 = scmp.eq.s32.totalorder %s27, 1
      %p162 = por %p160, %p161
      %p163 = scmp.ne.s32.totalorder %s154, %s155
      %p164 = scmp.eq.s32.totalorder %s27, 0
      %p165 = por %p163, %p164
      %p166 = scmp.ne.s32.totalorder %s154, %s155
      %p167 = scmp.eq.s32.totalorder %s28, 1
      %p168 = por %p166, %p167
      %p170 = scmp.ne.s32.totalorder %s155, %s169
      %p171 = scmp.eq.s32.totalorder %s28, 0
      %p172 = por %p170, %p171
      %s174 = sadd.s32 %s173, 1
      %p177 = scmp.eq.s32.totalorder %s22, 1
      %p178 = scmp.ne.s32.totalorder %s173, %s175
      %p179 = scmp.eq.s32.totalorder %s22, 0
      %p180 = por %p178, %p179
      %p181 = scmp.ne.s32.totalorder %s173, %s175
      %p182 = scmp.eq.s32.totalorder %s27, 1
      %p183 = por %p181, %p182
      %p184 = scmp.ne.s32.totalorder %s175, %s176
      %p185 = scmp.eq.s32.totalorder %s27, 0
      %p186 = por %p184, %p185
      %p187 = scmp.ne.s32.totalorder %s175, %s176
      %p188 = scmp.eq.s32.totalorder %s28, 1
      %p189 = por %p187, %p188
      %p191 = scmp.ne.s32.totalorder %s176, %s190
      %p192 = scmp.eq.s32.totalorder %s28, 0
      %p193 = por %p191, %p192
      %s195 = sadd.s32 %s194, 1
      %p198 = scmp.eq.s32.totalorder %s22, 1
      %p199 = scmp.ne.s32.totalorder %s194, %s196
      %p200 = scmp.eq.s32.totalorder %s22, 0
      %p201 = por %p199, %p200
      %p202 = scmp.ne.s32.totalorder %s194, %s196
      %p203 = scmp.eq.s32.totalorder %s27, 1
      %p204 = por %p202, %p203
      %p205 = scmp.ne.s32.totalorder %s196, %s197
      %p206 = scmp.eq.s32.totalorder %s27, 0
      %p207 = por %p205, %p206
      %p208 = scmp.ne.s32.totalorder %s196, %s197
      %p209 = scmp.eq.s32.totalorder %s28, 1
      %p210 = por %p208, %p209
      %p212 = scmp.ne.s32.totalorder %s197, %s211
      %p213 = scmp.eq.s32.totalorder %s28, 0
      %p214 = por %p212, %p213
      %s216 = sadd.s32 %s215, 1
      %p219 = scmp.eq.s32.totalorder %s22, 1
      %p220 = scmp.ne.s32.totalorder %s215, %s217
      %p221 = scmp.eq.s32.totalorder %s22, 0
      %p222 = por %p220, %p221
      %p223 = scmp.ne.s32.totalorder %s215, %s217
      %p224 = scmp.eq.s32.totalorder %s27, 1
      %p225 = por %p223, %p224
      %p226 = scmp.ne.s32.totalorder %s217, %s218
      %p227 = scmp.eq.s32.totalorder %s27, 0
      %p228 = por %p226, %p227
      %p229 = scmp.ne.s32.totalorder %s217, %s218
      %p230 = scmp.eq.s32.totalorder %s28, 1
      %p231 = por %p229, %p230
      %p233 = scmp.ne.s32.totalorder %s218, %s232
      %p234 = scmp.eq.s32.totalorder %s28, 0
      %p235 = por %p233, %p234
      %s237 = sadd.s32 %s236, 1
      %p240 = scmp.eq.s32.totalorder %s22, 1
      %p241 = scmp.ne.s32.totalorder %s236, %s238
      %p242 = scmp.eq.s32.totalorder %s22, 0
      %p243 = por %p241, %p242
      %p244 = scmp.ne.s32.totalorder %s236, %s238
      %p245 = scmp.eq.s32.totalorder %s27, 1
      %p246 = por %p244, %p245
      %p247 = scmp.ne.s32.totalorder %s238, %s239
      %p248 = scmp.eq.s32.totalorder %s27, 0
      %p249 = por %p247, %p248
      %p250 = scmp.ne.s32.totalorder %s238, %s239
      %p251 = scmp.eq.s32.totalorder %s28, 1
      %p252 = por %p250, %p251
      %p254 = scmp.ne.s32.totalorder %s239, %s253
      %p255 = scmp.eq.s32.totalorder %s28, 0
      %p256 = por %p254, %p255
      %s258 = sadd.s32 %s257, 1
      %p261 = scmp.eq.s32.totalorder %s22, 1
      %p262 = scmp.ne.s32.totalorder %s257, %s259
      %p263 = scmp.eq.s32.totalorder %s22, 0
      %p264 = por %p262, %p263
      %p265 = scmp.ne.s32.totalorder %s257, %s259
      %p266 = scmp.eq.s32.totalorder %s27, 1
      %p267 = por %p265, %p266
      %p268 = scmp.ne.s32.totalorder %s259, %s260
      %p269 = scmp.eq.s32.totalorder %s27, 0
      %p270 = por %p268, %p269
      %p271 = scmp.ne.s32.totalorder %s259, %s260
      %p272 = scmp.eq.s32.totalorder %s28, 1
      %p273 = por %p271, %p272
      %p275 = scmp.ne.s32.totalorder %s260, %s274
      %p276 = scmp.eq.s32.totalorder %s28, 0
      %p277 = por %p275, %p276
      %s279 = sadd.s32 %s278, 1
      %p282 = scmp.eq.s32.totalorder %s22, 1
      %p283 = scmp.ne.s32.totalorder %s278, %s280
      %p284 = scmp.eq.s32.totalorder %s22, 0
      %p285 = por %p283, %p284
      %p286 = scmp.ne.s32.totalorder %s278, %s280
      %p287 = scmp.eq.s32.totalorder %s27, 1
      %p288 = por %p286, %p287
      %p289 = scmp.ne.s32.totalorder %s280, %s281
      %p290 = scmp.eq.s32.totalorder %s27, 0
      %p291 = por %p289, %p290
      %p292 = scmp.ne.s32.totalorder %s280, %s281
      %p293 = scmp.eq.s32.totalorder %s28, 1
      %p294 = por %p292, %p293
      %p296 = scmp.ne.s32.totalorder %s281, %s295
      %p297 = scmp.eq.s32.totalorder %s28, 0
      %p298 = por %p296, %p297
      %s300 = sadd.s32 %s299, 1
      %p303 = scmp.eq.s32.totalorder %s22, 1
      %p304 = scmp.ne.s32.totalorder %s299, %s301
      %p305 = scmp.eq.s32.totalorder %s22, 0
      %p306 = por %p304, %p305
      %p307 = scmp.ne.s32.totalorder %s299, %s301
      %p308 = scmp.eq.s32.totalorder %s27, 1
      %p309 = por %p307, %p308
      %p310 = scmp.ne.s32.totalorder %s301, %s302
      %p311 = scmp.eq.s32.totalorder %s27, 0
      %p312 = por %p310, %p311
      %p313 = scmp.ne.s32.totalorder %s301, %s302
      %p314 = scmp.eq.s32.totalorder %s28, 1
      %p315 = por %p313, %p314
      %p317 = scmp.ne.s32.totalorder %s302, %s316
      %p318 = scmp.eq.s32.totalorder %s28, 0
      %p319 = por %p317, %p318
      %s320 = ssub.s32 %s29, %s41
      %s321 = ssub.s32 %s30, %s37
      %s322 = sor.u32 %s320, %s321
      %p323 = scmp.eq.s32.totalorder %s322, 0
      %s325 = sadd.s32 %s324, 1
      %s326 = scalar_select %p323, %s324, %s325
      %p329 = pneg %p323
      %p330 = scmp.eq.s32.totalorder %s22, 1
      %p331 = por %p329, %p330
      %p332 = scmp.ne.s32.totalorder %s324, %s327
      %p333 = scmp.eq.s32.totalorder %s22, 0
      %p334 = por %p332, %p333
      %p335 = scmp.ne.s32.totalorder %s324, %s327
      %p336 = scmp.eq.s32.totalorder %s27, 1
      %p337 = por %p335, %p336
      %p338 = scmp.ne.s32.totalorder %s327, %s328
      %p339 = scmp.eq.s32.totalorder %s27, 0
      %p340 = por %p338, %p339
      %p341 = scmp.ne.s32.totalorder %s327, %s328
      %p342 = scmp.eq.s32.totalorder %s28, 1
      %p343 = por %p341, %p342
      %p345 = scmp.ne.s32.totalorder %s328, %s344
      %p346 = scmp.eq.s32.totalorder %s28, 0
      %p347 = por %p345, %p346
      %p348 = scmp.le.s32.totalorder 1, %s22
      %p349 = scmp.lt.s32.totalorder %s22, 3
      %p350 = pnand %p348, %p349
      %p351 = pneg %p350
      // Predicated region
      $region9: #{tpu_custom_call.1} parent=5 // pred_check
        _
      $region10: #{tpu_custom_call.1} parent=5 // pred_check_branch
        %353 = sbr.rel (%p350) target = $region12
      $region11: #{tpu_custom_call.1} parent=5 // pred_region
        %s354 = ssub.s32 %s22, 1
        // Predicated region
        $region13: #{tpu_custom_call.1} parent=11 // pred_check
          %p355 = pneg %p81
        $region14: #{tpu_custom_call.1} parent=11 // pred_check_branch
          %357 = sbr.rel (%p355) target = $region16
        $region15: #{tpu_custom_call.1} parent=11 // pred_region
          _
        $region16: #{tpu_custom_call.1} parent=11 // pred_fallthru
          _
        // Predicated region
        $region17: #{tpu_custom_call.1} parent=11 // pred_check
          %p358 = pneg %p102
        $region18: #{tpu_custom_call.1} parent=11 // pred_check_branch
          %360 = sbr.rel (%p358) target = $region20
        $region19: #{tpu_custom_call.1} parent=11 // pred_region
          _
        $region20: #{tpu_custom_call.1} parent=11 // pred_fallthru
          _
        // Predicated region
        $region21: #{tpu_custom_call.1} parent=11 // pred_check
          %p361 = pneg %p123
        $region22: #{tpu_custom_call.1} parent=11 // pred_check_branch
          %363 = sbr.rel (%p361) target = $region24
        $region23: #{tpu_custom_call.1} parent=11 // pred_region
          _
        $region24: #{tpu_custom_call.1} parent=11 // pred_fallthru
          _
        // Predicated region
        $region25: #{tpu_custom_call.1} parent=11 // pred_check
          %p364 = pneg %p144
        $region26: #{tpu_custom_call.1} parent=11 // pred_check_branch
          %366 = sbr.rel (%p364) target = $region28
        $region27: #{tpu_custom_call.1} parent=11 // pred_region
          _
        $region28: #{tpu_custom_call.1} parent=11 // pred_fallthru
          _
        // Predicated region
        $region29: #{tpu_custom_call.1} parent=11 // pred_check
          %p367 = pneg %p165
        $region30: #{tpu_custom_call.1} parent=11 // pred_check_branch
          %369 = sbr.rel (%p367) target = $region32
        $region31: #{tpu_custom_call.1} parent=11 // pred_region
          _
        $region32: #{tpu_custom_call.1} parent=11 // pred_fallthru
          _
        // Predicated region
        $region33: #{tpu_custom_call.1} parent=11 // pred_check
          %p370 = pneg %p186
        $region34: #{tpu_custom_call.1} parent=11 // pred_check_branch
          %372 = sbr.rel (%p370) target = $region36
        $region35: #{tpu_custom_call.1} parent=11 // pred_region
          _
        $region36: #{tpu_custom_call.1} parent=11 // pred_fallthru
          _
        // Predicated region
        $region37: #{tpu_custom_call.1} parent=11 // pred_check
          %p373 = pneg %p207
        $region38: #{tpu_custom_call.1} parent=11 // pred_check_branch
          %375 = sbr.rel (%p373) target = $region40
        $region39: #{tpu_custom_call.1} parent=11 // pred_region
          _
        $region40: #{tpu_custom_call.1} parent=11 // pred_fallthru
          _
        // Predicated region
        $region41: #{tpu_custom_call.1} parent=11 // pred_check
          %p376 = pneg %p228
        $region42: #{tpu_custom_call.1} parent=11 // pred_check_branch
          %378 = sbr.rel (%p376) target = $region44
        $region43: #{tpu_custom_call.1} parent=11 // pred_region
          _
        $region44: #{tpu_custom_call.1} parent=11 // pred_fallthru
          _
        // Predicated region
        $region45: #{tpu_custom_call.1} parent=11 // pred_check
          %p379 = pneg %p249
        $region46: #{tpu_custom_call.1} parent=11 // pred_check_branch
          %381 = sbr.rel (%p379) target = $region48
        $region47: #{tpu_custom_call.1} parent=11 // pred_region
          _
        $region48: #{tpu_custom_call.1} parent=11 // pred_fallthru
          _
        // Predicated region
        $region49: #{tpu_custom_call.1} parent=11 // pred_check
          %p382 = pneg %p270
        $region50: #{tpu_custom_call.1} parent=11 // pred_check_branch
          %384 = sbr.rel (%p382) target = $region52
        $region51: #{tpu_custom_call.1} parent=11 // pred_region
          _
        $region52: #{tpu_custom_call.1} parent=11 // pred_fallthru
          _
        // Predicated region
        $region53: #{tpu_custom_call.1} parent=11 // pred_check
          %p385 = pneg %p291
        $region54: #{tpu_custom_call.1} parent=11 // pred_check_branch
          %387 = sbr.rel (%p385) target = $region56
        $region55: #{tpu_custom_call.1} parent=11 // pred_region
          _
        $region56: #{tpu_custom_call.1} parent=11 // pred_fallthru
          _
        // Predicated region
        $region57: #{tpu_custom_call.1} parent=11 // pred_check
          %p388 = pneg %p312
        $region58: #{tpu_custom_call.1} parent=11 // pred_check_branch
          %390 = sbr.rel (%p388) target = $region60
        $region59: #{tpu_custom_call.1} parent=11 // pred_region
          _
        $region60: #{tpu_custom_call.1} parent=11 // pred_fallthru
          _
      $region12: #{tpu_custom_call.1} parent=5 // pred_fallthru
        _
      %p391 = scmp.lt.s32.totalorder %s22, 2
      // Predicated region
      $region61: #{tpu_custom_call.1} parent=5 // pred_check
        %p392 = pneg %p391
      $region62: #{tpu_custom_call.1} parent=5 // pred_check_branch
        %394 = sbr.rel (%p392) target = $region64
      $region63: #{tpu_custom_call.1} parent=5 // pred_region
        // Predicated region
        $region65: #{tpu_custom_call.1} parent=63 // pred_check
          %p395 = pneg %p54
        $region66: #{tpu_custom_call.1} parent=63 // pred_check_branch
          %397 = sbr.rel (%p395) target = $region68
        $region67: #{tpu_custom_call.1} parent=63 // pred_region
          %p398 = scmp.lt.s32.totalorder %s29, 1
          %s399 = scalar_select %p398, %s29, 1
          %s400 = smul.addr %s399, 8
          %s401 = scalar_lea.vmem %s0, %s400
        $region68: #{tpu_custom_call.1} parent=63 // pred_fallthru
          _
      $region64: #{tpu_custom_call.1} parent=5 // pred_fallthru
        _
      %p402 = scmp.le.s32.totalorder 1, %s22
      %p403 = scmp.lt.s32.totalorder %s22, 3
      %p404 = pnand %p402, %p403
      %p405 = pneg %p404
      // Predicated region
      $region69: #{tpu_custom_call.1} parent=5 // pred_check
        _
      $region70: #{tpu_custom_call.1} parent=5 // pred_check_branch
        %407 = sbr.rel (%p404) target = $region72
      $region71: #{tpu_custom_call.1} parent=5 // pred_region
        %s408 = ssub.s32 %s22, 1
        %p409 = scmp.lt.s32.totalorder %s31, 1
        %s410 = scalar_select %p409, %s31, 1
        %s411 = smul.addr %s410, 8
        %s412 = scalar_lea.vmem %s0, %s411
        %p413 = pneg %p60
        %p414 = pneg %p57
        %p415 = pneg %p81
        %p416 = pneg %p78
        %p417 = pneg %p102
        %p418 = pneg %p99
        %p419 = pneg %p123
        %p420 = pneg %p120
        %p421 = pneg %p144
        %p422 = pneg %p141
        %p423 = pneg %p165
        %p424 = pneg %p162
        %p425 = pneg %p186
        %p426 = pneg %p183
        %p427 = pneg %p207
        %p428 = pneg %p204
        %p429 = pneg %p228
        %p430 = pneg %p225
        %p431 = pneg %p249
        %p432 = pneg %p246
        %p433 = pneg %p270
        %p434 = pneg %p267
        %p435 = pneg %p291
        %p436 = pneg %p288
        %p437 = pneg %p312
        %p438 = pneg %p309
        %p439 = pneg %p340
        %p440 = pneg %p337
        %s441 = sand.u32 %s327, 1
        %s442 = scalar_lea.sflag [#allocation6], %s441
        %s443 = sand.u32 %s327, 1
        %s444 = smul.addr %s443, 8
        %s445 = scalar_lea.vmem [#allocation5], %s444
        %p446 = scmp.lt.s32.totalorder %s31, 1
        %s447 = scalar_select %p446, %s31, 1
        %s448 = smul.addr %s447, 8
        %s449 = scalar_lea.vmem %s0, %s448
        %s451 = smul.u32 %s32, 8
        %p452 = scmp.eq.s32.totalorder %s32, 0
        // Predicated region
        $region73: #{tpu_custom_call.1} parent=71 // pred_check
          %p453 = pneg %p452
        $region74: #{tpu_custom_call.1} parent=71 // pred_check_branch
          %455 = sbr.rel (%p453) target = $region76
        $region75: #{tpu_custom_call.1} parent=71 // pred_region
          %v456 = vld [vmem:[%s449] sm:$0xff]
          %vm457 = vcmask 261120
          %v458 = vsel %vm457, %v456, 0.0
          %459 = vadd.xlane.f32.xlu0 %v458
          %v460 = vpop.xlane.xlu0 %459
          %v461 = vrcp.pop 32.0
          %v462 = vmul.f32 32.0, %v461
          %v463 = vsub.f32 1.0, %v462
          %v464 = vmul.f32 %v461, %v463
          %v465 = vadd.f32 %v461, %v464
          %vm466 = vweird.f32 %v461
          %v467 = vsel %vm466, %v461, %v465
          %v468 = vmul.f32 %v460, %v467
          %v469 = vsub.f32 %v456, %v468
          %v470 = vmul.f32 %v469, %v469
          %v471 = vsel %vm457, %v470, 0.0
          %472 = vadd.xlane.f32.xlu0 %v471
          %v473 = vpop.xlane.xlu0 %472
          %v474 = vmul.f32 %v473, %v467
          %v475 = vadd.f32 %v474, 1e-05
          %v476 = vrsqrt.pop %v475
          %v477 = vmul.f32 %v476, %v475
          %v478 = vmul.f32 %v477, %v476
          %v479 = vmul.f32 0.5, %v478
          %v480 = vsub.f32 1.5, %v479
          %v481 = vmul.f32 %v476, %v480
          %vm482 = vweird.f32 %v475
          %vm483 = vweird.f32 %v476
          %vm484 = vmor %vm482, %vm483
          %v485 = vsel %vm484, %v476, %v481
          %v486 = vmul.f32 %v469, %v485
          %v487 = vld [vmem:[%s1] sm:$0x1]
          %v489 = vperm.slane %v487, 0
          %v491 = vmul.f32 %v486, %v489
          %v492 = vld [vmem:[%s2] sm:$0x1]
          %v494 = vperm.slane %v492, 0
          %v496 = vadd.f32 %v491, %v494
          %v497 = vpack.c.bf16 %v496, %v496
          %v498 = vld [vmem:[%s3] sm:$0xf]
          %v499 = vld [vmem:[%s3 + $0x4] sm:$0xf]
          %v500 = vld [vmem:[%s3 + $0x8] sm:$0xf]
          %v501 = vld [vmem:[%s3 + $0xc] sm:$0xf]
          %v502 = vld [vmem:[%s4] sm:$0x1]
          %v504 = vperm.slane %v502, 0
          %v510 = vunpack.c.l.b16 %v498
          %v511 = vunpack.c.l.b16 %v499
          %v512 = vunpack.c.l.b16 %v500
          %v513 = vunpack.c.l.b16 %v501
          %v514 = vpack.c.b16 %v511, %v510
          %v515 = vpack.c.b16 %v513, %v512
          %v519 = vsel %vm457, %v497, 0
          %521 = vmatpush.bf16.msra.mxu0 0
          %522 = vmatpush.bf16.msra.mxu0 0
          %523 = vmatpush.bf16.msra.mxu0 0
          %524 = vmatpush.bf16.msra.mxu0 0
          %525 = vmatpush.bf16.msra.mxu0 0
          %526 = vmatpush.bf16.msra.mxu0 0
          %527 = vmatpush.bf16.msra.mxu0 %v515
          %528 = vmatpush.bf16.msra.mxu0 %v514
          %529 = vmatmul.bf16.gmra.mxu0 %v519
          %v530 = vpop.f32.mrf.mxu0
          %v531 = vadd.f32 %v504, %v530
          %v532 = vpop.f32.mrf.mxu0
          %533 = vdwg.mxu0
          %v534 = vpack.c.bf16 %v531, %v531
          %vm535 = vcmask 60416
          %536 = vst.msk [vmem:[#allocation2] sm:$0xf] %vm535, %v534
          %538 = vrot.lane.b32.xlu0 %v534, 96
          %v539 = vpop.permute.xlu0 %538
          %541 = vst.msk [vmem:[#allocation3] sm:$0xf] %vm535, %v539
          %542 = vrot.lane.b32.xlu0 %v534, 64
          %v543 = vpop.permute.xlu0 %542
          %545 = vst.msk [vmem:[#allocation4] sm:$0xf] %vm535, %v543
          %546 = vrot.lane.b32.xlu0 %v534, 120
          %v547 = vpop.permute.xlu0 %546
          %s549 = scalar_lea.vmem [#allocation2], 4
          %550 = vst.msk [vmem:[%s549] sm:$0xf] %vm535, %v547
          %551 = vrot.lane.b32.xlu0 %v534, 88
          %v552 = vpop.permute.xlu0 %551
          %s554 = scalar_lea.vmem [#allocation3], 4
          %555 = vst.msk [vmem:[%s554] sm:$0xf] %vm535, %v552
          %556 = vrot.lane.b32.xlu0 %v534, 56
          %v557 = vpop.permute.xlu0 %556
          %s559 = scalar_lea.vmem [#allocation4], 4
          %560 = vst.msk [vmem:[%s559] sm:$0xf] %vm535, %v557
          %561 = vrot.lane.b32.xlu0 %v534, 112
          %v562 = vpop.permute.xlu0 %561
          %s564 = scalar_lea.vmem [#allocation2], 8
          %565 = vst.msk [vmem:[%s564] sm:$0xf] %vm535, %v562
          %566 = vrot.lane.b32.xlu0 %v534, 80
          %v567 = vpop.permute.xlu0 %566
          %s569 = scalar_lea.vmem [#allocation3], 8
          %570 = vst.msk [vmem:[%s569] sm:$0xf] %vm535, %v567
          %571 = vrot.lane.b32.xlu0 %v534, 48
          %v572 = vpop.permute.xlu0 %571
          %s574 = scalar_lea.vmem [#allocation4], 8
          %575 = vst.msk [vmem:[%s574] sm:$0xf] %vm535, %v572
          %576 = vrot.lane.b32.xlu0 %v534, 104
          %v577 = vpop.permute.xlu0 %576
          %s579 = scalar_lea.vmem [#allocation2], 12
          %580 = vst.msk [vmem:[%s579] sm:$0xf] %vm535, %v577
          %581 = vrot.lane.b32.xlu0 %v534, 72
          %v582 = vpop.permute.xlu0 %581
          %s584 = scalar_lea.vmem [#allocation3], 12
          %585 = vst.msk [vmem:[%s584] sm:$0xf] %vm535, %v582
          %586 = vrot.lane.b32.xlu0 %v534, 40
          %v587 = vpop.permute.xlu0 %586
          %s589 = scalar_lea.vmem [#allocation4], 12
          %590 = vst.msk [vmem:[%s589] sm:$0xf] %vm535, %v587
        $region76: #{tpu_custom_call.1} parent=71 // pred_fallthru
          _
        %s591 = scalar_lea.vmem %s449, %s451
        %v592 = vld [vmem:[%s591] sm:$0xff]
        %s593 = sshra.s32 %s451, 3
        %s594 = sand.u32 %s451, 7
        %s595 = smul.addr %s593, 4
        %s596 = scalar_lea.vmem [#allocation2], %s595
        %v597 = vld [vmem:[%s596] sm:$0xf]
        %v598 = vld [vmem:[%s596 + $0x4] sm:$0xf]
        %v599 = vld [vmem:[%s596 + $0x8] sm:$0xf]
        %v600 = vld [vmem:[%s596 + $0xc] sm:$0xf]
        %v601 = vld [vmem:[#allocation3] sm:$0xf]
        %v602 = vld [vmem:[#allocation3 + $0x4] sm:$0xf]
        %v603 = vld [vmem:[#allocation3 + $0x8] sm:$0xf]
        %v604 = vld [vmem:[#allocation3 + $0xc] sm:$0xf]
        %vm605 = vcmask 64512
        %v607 = vsel %vm605, %v597, 0
        %v610 = vsel %vm605, %v601, 0
        %612 = vmatpush.bf16.xpose.msra.mxu0 0
        %613 = vmatpush.bf16.xpose.msra.mxu0 0
        %614 = vmatpush.bf16.xpose.msra.mxu0 0
        %615 = vmatpush.bf16.xpose.msra.mxu0 0
        %616 = vmatpush.bf16.xpose.msra.mxu0 0
        %617 = vmatpush.bf16.xpose.msra.mxu0 0
        %618 = vmatpush.bf16.xpose.msra.mxu0 0
        %619 = vmatpush.bf16.xpose.msra.mxu0 %v610
        %620 = vmatmul.bf16.gmra.mxu0 %v607
        %v621 = vpop.f32.mrf.mxu0
        %v622 = vadd.f32 0.0, %v621
        %v623 = vpop.f32.mrf.mxu0
        %624 = vdwg.mxu0
        %v626 = vsel %vm605, %v598, 0
        %v629 = vsel %vm605, %v602, 0
        %631 = vmatpush.bf16.xpose.msra.mxu0 0
        %632 = vmatpush.bf16.xpose.msra.mxu0 0
        %633 = vmatpush.bf16.xpose.msra.mxu0 0
        %634 = vmatpush.bf16.xpose.msra.mxu0 0
        %635 = vmatpush.bf16.xpose.msra.mxu0 0
        %636 = vmatpush.bf16.xpose.msra.mxu0 0
        %637 = vmatpush.bf16.xpose.msra.mxu0 0
        %638 = vmatpush.bf16.xpose.msra.mxu0 %v629
        %639 = vmatmul.bf16.gmra.mxu0 %v626
        %v640 = vpop.f32.mrf.mxu0
        %v641 = vadd.f32 0.0, %v640
        %v642 = vpop.f32.mrf.mxu0
        %643 = vdwg.mxu0
        %v645 = vsel %vm605, %v599, 0
        %v648 = vsel %vm605, %v603, 0
        %650 = vmatpush.bf16.xpose.msra.mxu0 0
        %651 = vmatpush.bf16.xpose.msra.mxu0 0
        %652 = vmatpush.bf16.xpose.msra.mxu0 0
        %653 = vmatpush.bf16.xpose.msra.mxu0 0
        %654 = vmatpush.bf16.xpose.msra.mxu0 0
        %655 = vmatpush.bf16.xpose.msra.mxu0 0
        %656 = vmatpush.bf16.xpose.msra.mxu0 0
        %657 = vmatpush.bf16.xpose.msra.mxu0 %v648
        %658 = vmatmul.bf16.gmra.mxu0 %v645
        %v659 = vpop.f32.mrf.mxu0
        %v660 = vadd.f32 0.0, %v659
        %v661 = vpop.f32.mrf.mxu0
        %662 = vdwg.mxu0
        %v664 = vsel %vm605, %v600, 0
        %v667 = vsel %vm605, %v604, 0
        %669 = vmatpush.bf16.xpose.msra.mxu0 0
        %670 = vmatpush.bf16.xpose.msra.mxu0 0
        %671 = vmatpush.bf16.xpose.msra.mxu0 0
        %672 = vmatpush.bf16.xpose.msra.mxu0 0
        %673 = vmatpush.bf16.xpose.msra.mxu0 0
        %674 = vmatpush.bf16.xpose.msra.mxu0 0
        %675 = vmatpush.bf16.xpose.msra.mxu0 0
        %676 = vmatpush.bf16.xpose.msra.mxu0 %v667
        %677 = vmatmul.bf16.gmra.mxu0 %v664
        %v678 = vpop.f32.mrf.mxu0
        %v679 = vadd.f32 0.0, %v678
        %v680 = vpop.f32.mrf.mxu0
        %681 = vdwg.mxu0
        %v682 = vsel %vm605, %v622, -inf
        %683 = vmax.xlane.f32.xlu0 %v682
        %v684 = vpop.xlane.xlu0 %683
        %v685 = vsel %vm605, %v641, -inf
        %686 = vmax.xlane.f32.xlu0 %v685
        %v687 = vpop.xlane.xlu0 %686
        %v688 = vsel %vm605, %v660, -inf
        %689 = vmax.xlane.f32.xlu0 %v688
        %v690 = vpop.xlane.xlu0 %689
        %v691 = vsel %vm605, %v679, -inf
        %692 = vmax.xlane.f32.xlu0 %v691
        %v693 = vpop.xlane.xlu0 %692
        %v694 = vsub.f32 %v622, %v684
        %v695 = vsub.f32 %v641, %v687
        %v696 = vsub.f32 %v660, %v690
        %v697 = vsub.f32 %v679, %v693
        %v698 = vmul.f32 %v694, 1.442695
        %v699 = vpow.pop %v698
        %v700 = vmul.f32 %v695, 1.442695
        %v701 = vpow.pop %v700
        %v702 = vmul.f32 %v696, 1.442695
        %v703 = vpow.pop %v702
        %v704 = vmul.f32 %v697, 1.442695
        %v705 = vpow.pop %v704
        %v706 = vsel %vm605, %v699, 0.0
        %707 = vadd.xlane.f32.xlu0 %v706
        %v708 = vpop.xlane.xlu0 %707
        %v709 = vsel %vm605, %v701, 0.0
        %710 = vadd.xlane.f32.xlu0 %v709
        %v711 = vpop.xlane.xlu0 %710
        %v712 = vsel %vm605, %v703, 0.0
        %713 = vadd.xlane.f32.xlu0 %v712
        %v714 = vpop.xlane.xlu0 %713
        %v715 = vsel %vm605, %v705, 0.0
        %716 = vadd.xlane.f32.xlu0 %v715
        %v717 = vpop.xlane.xlu0 %716
        %v718 = vrcp.pop %v708
        %v719 = vrcp.pop %v711
        %v720 = vrcp.pop %v714
        %v721 = vrcp.pop %v717
        %v722 = vmul.f32 %v699, %v718
        %v723 = vmul.f32 %v701, %v719
        %v724 = vmul.f32 %v703, %v720
        %v725 = vmul.f32 %v705, %v721
        %v726 = vpack.c.bf16 %v722, %v722
        %v727 = vpack.c.bf16 %v723, %v723
        %v728 = vpack.c.bf16 %v724, %v724
        %v729 = vpack.c.bf16 %v725, %v725
        %v730 = vld [vmem:[#allocation4] sm:$0xf]
        %v731 = vld [vmem:[#allocation4 + $0x4] sm:$0xf]
        %v732 = vld [vmem:[#allocation4 + $0x8] sm:$0xf]
        %v733 = vld [vmem:[#allocation4 + $0xc] sm:$0xf]
        %v735 = vsel %vm605, %v726, 0
        %vm737 = vcmask 1043456
        %v739 = vsel %vm737, %v730, 0
        %741 = vmatpush.bf16.msra.mxu0 0
        %742 = vmatpush.bf16.msra.mxu0 0
        %743 = vmatpush.bf16.msra.mxu0 0
        %744 = vmatpush.bf16.msra.mxu0 0
        %745 = vmatpush.bf16.msra.mxu0 0
        %746 = vmatpush.bf16.msra.mxu0 0
        %747 = vmatpush.bf16.msra.mxu0 0
        %748 = vmatpush.bf16.msra.mxu0 %v739
        %749 = vmatmul.bf16.gmra.mxu0 %v735
        %v750 = vpop.f32.mrf.mxu0
        %v751 = vadd.f32 0.0, %v750
        %v752 = vpop.f32.mrf.mxu0
        %753 = vdwg.mxu0
        %v755 = vsel %vm605, %v727, 0
        %v758 = vsel %vm737, %v731, 0
        %760 = vmatpush.bf16.msra.mxu0 0
        %761 = vmatpush.bf16.msra.mxu0 0
        %762 = vmatpush.bf16.msra.mxu0 0
        %763 = vmatpush.bf16.msra.mxu0 0
        %764 = vmatpush.bf16.msra.mxu0 0
        %765 = vmatpush.bf16.msra.mxu0 0
        %766 = vmatpush.bf16.msra.mxu0 0
        %767 = vmatpush.bf16.msra.mxu0 %v758
        %768 = vmatmul.bf16.gmra.mxu0 %v755
        %v769 = vpop.f32.mrf.mxu0
        %v770 = vadd.f32 0.0, %v769
        %v771 = vpop.f32.mrf.mxu0
        %772 = vdwg.mxu0
        %v774 = vsel %vm605, %v728, 0
        %v777 = vsel %vm737, %v732, 0
        %779 = vmatpush.bf16.msra.mxu0 0
        %780 = vmatpush.bf16.msra.mxu0 0
        %781 = vmatpush.bf16.msra.mxu0 0
        %782 = vmatpush.bf16.msra.mxu0 0
        %783 = vmatpush.bf16.msra.mxu0 0
        %784 = vmatpush.bf16.msra.mxu0 0
        %785 = vmatpush.bf16.msra.mxu0 0
        %786 = vmatpush.bf16.msra.mxu0 %v777
        %787 = vmatmul.bf16.gmra.mxu0 %v774
        %v788 = vpop.f32.mrf.mxu0
        %v789 = vadd.f32 0.0, %v788
        %v790 = vpop.f32.mrf.mxu0
        %791 = vdwg.mxu0
        %v793 = vsel %vm605, %v729, 0
        %v796 = vsel %vm737, %v733, 0
        %798 = vmatpush.bf16.msra.mxu0 0
        %799 = vmatpush.bf16.msra.mxu0 0
        %800 = vmatpush.bf16.msra.mxu0 0
        %801 = vmatpush.bf16.msra.mxu0 0
        %802 = vmatpush.bf16.msra.mxu0 0
        %803 = vmatpush.bf16.msra.mxu0 0
        %804 = vmatpush.bf16.msra.mxu0 0
        %805 = vmatpush.bf16.msra.mxu0 %v796
        %806 = vmatmul.bf16.gmra.mxu0 %v793
        %v807 = vpop.f32.mrf.mxu0
        %v808 = vadd.f32 0.0, %v807
        %v809 = vpop.f32.mrf.mxu0
        %810 = vdwg.mxu0
        %v811 = vpack.c.bf16 %v751, %v751
        %v812 = vpack.c.bf16 %v770, %v770
        %v813 = vpack.c.bf16 %v789, %v789
        %v814 = vpack.c.bf16 %v808, %v808
        %v816 = vunpack.c.l.b16 %v812
        %v817 = vpack.c.b16 %v816, %v816
        %818 = vrot.lane.b32.xlu0 %v817, 8
        %v819 = vpop.permute.xlu0 %818
        %v821 = vunpack.c.l.b16 %v813
        %v822 = vpack.c.b16 %v821, %v821
        %823 = vrot.lane.b32.xlu0 %v822, 16
        %v824 = vpop.permute.xlu0 %823
        %v826 = vunpack.c.l.b16 %v814
        %v827 = vpack.c.b16 %v826, %v826
        %828 = vrot.lane.b32.xlu0 %v827, 24
        %v829 = vpop.permute.xlu0 %828
        %v832 = vsel %vm605, %v811, %v819
        %vm833 = vcmask 130048
        %v835 = vsel %vm833, %v832, %v824
        %vm836 = vcmask 195584
        %v838 = vsel %vm836, %v835, %v829
        %v839 = vld [vmem:[%s5] sm:$0xf]
        %v840 = vld [vmem:[%s5 + $0x4] sm:$0xf]
        %v841 = vld [vmem:[%s5 + $0x8] sm:$0xf]
        %v842 = vld [vmem:[%s5 + $0xc] sm:$0xf]
        %v843 = vld [vmem:[%s6] sm:$0x1]
        %v845 = vperm.slane %v843, 0
        %v851 = vunpack.c.l.b16 %v839
        %v852 = vunpack.c.l.b16 %v840
        %v853 = vunpack.c.l.b16 %v841
        %v854 = vunpack.c.l.b16 %v842
        %v855 = vpack.c.b16 %v852, %v851
        %v856 = vpack.c.b16 %v854, %v853
        %vm859 = vcmask 261120
        %v860 = vsel %vm859, %v838, 0
        %862 = vmatpush.bf16.msra.mxu0 0
        %863 = vmatpush.bf16.msra.mxu0 0
        %864 = vmatpush.bf16.msra.mxu0 0
        %865 = vmatpush.bf16.msra.mxu0 0
        %866 = vmatpush.bf16.msra.mxu0 0
        %867 = vmatpush.bf16.msra.mxu0 0
        %868 = vmatpush.bf16.msra.mxu0 %v856
        %869 = vmatpush.bf16.msra.mxu0 %v855
        %870 = vmatmul.bf16.gmra.mxu0 %v860
        %v871 = vpop.f32.mrf.mxu0
        %v872 = vadd.f32 %v845, %v871
        %v873 = vpop.f32.mrf.mxu0
        %874 = vdwg.mxu0
        %v875 = vadd.f32 %v592, %v872
        %v876 = vsel %vm859, %v875, 0.0
        %877 = vadd.xlane.f32.xlu0 %v876
        %v878 = vpop.xlane.xlu0 %877
        %v879 = vrcp.pop 32.0
        %v880 = vmul.f32 32.0, %v879
        %v881 = vsub.f32 1.0, %v880
        %v882 = vmul.f32 %v879, %v881
        %v883 = vadd.f32 %v879, %v882
        %vm884 = vweird.f32 %v879
        %v885 = vsel %vm884, %v879, %v883
        %v886 = vmul.f32 %v878, %v885
        %v887 = vsub.f32 %v875, %v886
        %v888 = vmul.f32 %v887, %v887
        %v889 = vsel %vm859, %v888, 0.0
        %890 = vadd.xlane.f32.xlu0 %v889
        %v891 = vpop.xlane.xlu0 %890
        %v892 = vmul.f32 %v891, %v885
        %v893 = vadd.f32 %v892, 1e-05
        %v894 = vrsqrt.pop %v893
        %v895 = vmul.f32 %v894, %v893
        %v896 = vmul.f32 %v895, %v894
        %v897 = vmul.f32 0.5, %v896
        %v898 = vsub.f32 1.5, %v897
        %v899 = vmul.f32 %v894, %v898
        %vm900 = vweird.f32 %v893
        %vm901 = vweird.f32 %v894
        %vm902 = vmor %vm900, %vm901
        %v903 = vsel %vm902, %v894, %v899
        %v904 = vmul.f32 %v887, %v903
        %v905 = vld [vmem:[%s7] sm:$0x1]
        %v907 = vperm.slane %v905, 0
        %v909 = vmul.f32 %v904, %v907
        %v910 = vld [vmem:[%s8] sm:$0x1]
        %v912 = vperm.slane %v910, 0
        %v914 = vadd.f32 %v909, %v912
        %v915 = vpack.c.bf16 %v914, %v914
        %v916 = vld [vmem:[%s9] sm:$0xf]
        %v917 = vld [vmem:[%s9 + $0x4] sm:$0xf]
        %v918 = vld [vmem:[%s9 + $0x8] sm:$0xf]
        %v919 = vld [vmem:[%s9 + $0xc] sm:$0xf]
        %v920 = vld [vmem:[%s10] sm:$0x1]
        %v922 = vperm.slane %v920, 0
        %v928 = vunpack.c.l.b16 %v916
        %v929 = vunpack.c.l.b16 %v917
        %v930 = vunpack.c.l.b16 %v918
        %v931 = vunpack.c.l.b16 %v919
        %v932 = vpack.c.b16 %v929, %v928
        %v933 = vpack.c.b16 %v931, %v930
        %v937 = vsel %vm859, %v915, 0
        %939 = vmatpush.bf16.msra.mxu0 0
        %940 = vmatpush.bf16.msra.mxu0 0
        %941 = vmatpush.bf16.msra.mxu0 0
        %942 = vmatpush.bf16.msra.mxu0 0
        %943 = vmatpush.bf16.msra.mxu0 0
        %944 = vmatpush.bf16.msra.mxu0 0
        %945 = vmatpush.bf16.msra.mxu0 %v933
        %946 = vmatpush.bf16.msra.mxu0 %v932
        %947 = vmatmul.bf16.gmra.mxu0 %v937
        %v948 = vpop.f32.mrf.mxu0
        %v949 = vadd.f32 %v922, %v948
        %v950 = vpop.f32.mrf.mxu0
        %951 = vdwg.mxu0
        %v952 = vmul.f32 %v949, 1.702
        %v953 = vxor.u32 %v952, 2147483648
        %v954 = vmul.f32 %v953, 1.442695
        %v955 = vpow.pop %v954
        %v956 = vadd.f32 %v955, 1.0
        %v957 = vrcp.pop %v956
        %v958 = vmul.f32 %v956, %v957
        %v959 = vsub.f32 1.0, %v958
        %v960 = vmul.f32 %v957, %v959
        %v961 = vadd.f32 %v957, %v960
        %vm962 = vweird.f32 %v956
        %vm963 = vweird.f32 %v957
        %vm964 = vmor %vm962, %vm963
        %v965 = vsel %vm964, %v957, %v961
        %v966 = vand.u32 2147483647, %v956
        %vm967 = vcmp.eq.f32.partialorder %v966, 8.507059e+37
        %v968 = vand.u32 %v956, 2147483648
        %v969 = vor.u32 1.1754944e-38, %v968
        %v970 = vsel %vm967, %v969, %v965
        %v971 = vmul.f32 1.0, %v970
        %v972 = vmul.f32 %v949, %v971
        %v973 = vpack.c.bf16 %v972, %v972
        %v974 = vld [vmem:[%s11] sm:$0xf]
        %v975 = vld [vmem:[%s11 + $0x4] sm:$0xf]
        %v976 = vld [vmem:[%s11 + $0x8] sm:$0xf]
        %v977 = vld [vmem:[%s11 + $0xc] sm:$0xf]
        %v978 = vld [vmem:[%s11 + $0x10] sm:$0xf]
        %v979 = vld [vmem:[%s11 + $0x14] sm:$0xf]
        %v980 = vld [vmem:[%s11 + $0x18] sm:$0xf]
        %v981 = vld [vmem:[%s11 + $0x1c] sm:$0xf]
        %v982 = vld [vmem:[%s11 + $0x20] sm:$0xf]
        %v983 = vld [vmem:[%s11 + $0x24] sm:$0xf]
        %v984 = vld [vmem:[%s11 + $0x28] sm:$0xf]
        %v985 = vld [vmem:[%s11 + $0x2c] sm:$0xf]
        %v986 = vld [vmem:[%s11 + $0x30] sm:$0xf]
        %v987 = vld [vmem:[%s11 + $0x34] sm:$0xf]
        %v988 = vld [vmem:[%s11 + $0x38] sm:$0xf]
        %v989 = vld [vmem:[%s11 + $0x3c] sm:$0xf]
        %v990 = vld [vmem:[%s12] sm:$0x1]
        %v992 = vperm.slane %v990, 0
        %v1010 = vunpack.c.l.b16 %v974
        %v1011 = vunpack.c.l.b16 %v975
        %v1012 = vunpack.c.l.b16 %v976
        %v1013 = vunpack.c.l.b16 %v977
        %v1014 = vunpack.c.l.b16 %v978
        %v1015 = vunpack.c.l.b16 %v979
        %v1016 = vunpack.c.l.b16 %v980
        %v1017 = vunpack.c.l.b16 %v981
        %v1018 = vunpack.c.l.b16 %v982
        %v1019 = vunpack.c.l.b16 %v983
        %v1020 = vunpack.c.l.b16 %v984
        %v1021 = vunpack.c.l.b16 %v985
        %v1022 = vunpack.c.l.b16 %v986
        %v1023 = vunpack.c.l.b16 %v987
        %v1024 = vunpack.c.l.b16 %v988
        %v1025 = vunpack.c.l.b16 %v989
        %v1026 = vpack.c.b16 %v1011, %v1010
        %v1027 = vpack.c.b16 %v1013, %v1012
        %v1028 = vpack.c.b16 %v1015, %v1014
        %v1029 = vpack.c.b16 %v1017, %v1016
        %v1030 = vpack.c.b16 %v1019, %v1018
        %v1031 = vpack.c.b16 %v1021, %v1020
        %v1032 = vpack.c.b16 %v1023, %v1022
        %v1033 = vpack.c.b16 %v1025, %v1024
        %1042 = vmatpush.bf16.msra.mxu0 %v1033
        %1043 = vmatpush.bf16.msra.mxu0 %v1032
        %1044 = vmatpush.bf16.msra.mxu0 %v1031
        %1045 = vmatpush.bf16.msra.mxu0 %v1030
        %1046 = vmatpush.bf16.msra.mxu0 %v1029
        %1047 = vmatpush.bf16.msra.mxu0 %v1028
        %1048 = vmatpush.bf16.msra.mxu0 %v1027
        %1049 = vmatpush.bf16.msra.mxu0 %v1026
        %1050 = vmatmul.bf16.gmra.mxu0 %v973
        %v1051 = vpop.f32.mrf.mxu0
        %v1052 = vadd.f32 %v992, %v1051
        %v1053 = vpop.f32.mrf.mxu0
        %1054 = vdwg.mxu0
        %v1055 = vadd.f32 %v875, %v1052
        %1056 = vst.msk [vmem:[%s445] sm:$0xff] %vm859, %v1055
        %s1057 = sand.u32 %s327, 1
        %s1058 = scalar_lea.sflag [#allocation6], %s1057
        %s1059 = sand.u32 %s327, 1
        %s1060 = smul.addr %s1059, 8
        %s1061 = scalar_lea.vmem [#allocation5], %s1060
        // Predicated region
        $region77: #{tpu_custom_call.1} parent=71 // pred_check
          %p1062 = pneg %p337
        $region78: #{tpu_custom_call.1} parent=71 // pred_check_branch
          %1064 = sbr.rel (%p1062) target = $region80
        $region79: #{tpu_custom_call.1} parent=71 // pred_region
          %1066 = vsyncadd %s1058, 0
          %s1067 = sadd.s32 %s32, %s31
          %s1068 = smul.addr %s1067, 8
          %s1069 = scalar_lea.hbm %s13, %s1068
          %s1071 = sshll.u32 %s1061, 4
          %s1072 = int_to_ptr.vmem [resolvable:$true] %s1071
          %s1073 = sshll.u32 %s1069, 4
          %s1074 = int_to_ptr.hbm [resolvable:$true] %s1073
          %1076 = dma.vmem_to_hbm [thread:$0]  %s1072, 128, %s1074, %s1058
        $region80: #{tpu_custom_call.1} parent=71 // pred_fallthru
          _
      $region72: #{tpu_custom_call.1} parent=5 // pred_fallthru
        _
      %p1077 = scmp.le.s32.totalorder 2, %s22
      // Predicated region
      $region81: #{tpu_custom_call.1} parent=5 // pred_check
        %p1078 = pneg %p1077
      $region82: #{tpu_custom_call.1} parent=5 // pred_check_branch
        %1080 = sbr.rel (%p1078) target = $region84
      $region83: #{tpu_custom_call.1} parent=5 // pred_region
        %s1081 = ssub.s32 %s22, 2
        // Predicated region
        $region85: #{tpu_custom_call.1} parent=83 // pred_check
          %p1082 = pneg %p343
        $region86: #{tpu_custom_call.1} parent=83 // pred_check_branch
          %1084 = sbr.rel (%p1082) target = $region88
        $region87: #{tpu_custom_call.1} parent=83 // pred_region
          %s1085 = sand.u32 %s328, 1
          %s1086 = scalar_lea.sflag [#allocation6], %s1085
          %s1087 = sand.u32 %s328, 1
          %s1088 = smul.addr %s1087, 8
          %s1089 = scalar_lea.vmem [#allocation5], %s1088
          %1091 = dma.done %s1086, 128
        $region88: #{tpu_custom_call.1} parent=83 // pred_fallthru
          _
      $region84: #{tpu_custom_call.1} parent=5 // pred_fallthru
        _
    $region6: #{tpu_custom_call.1} parent=1 // loop_footer
      %s26 = sadd.s32 1, %s22
    $region7: #{tpu_custom_call.1} parent=1 // loop_footer_branch
      %21 = sbr.rel target = $region3
    $region8: #{tpu_custom_call.1} parent=1 // loop_exit
      _
    %1092 = vsyncpa [#allocation6], 1
    %s1093 = scalar_lea.sflag [#allocation6], 1
    %1094 = vsyncpa %s1093, 1

</llo_original>
